<compile_context>
chip_gen: v7x
topology: tpu7x:2x2x1
jax: 0.10.0
libtpu: 0.0.40
codegen_flags: <defaults>
</compile_context>

<pallas_src>
import re

import jax
import jax.numpy as jnp
from jax.experimental import pallas as pl
from jax.experimental.pallas import tpu as pltpu


_LANE = 128                   # TPU lane width; tile last dim is a multiple of this
_MAX_COLS = 1024              # preferred lane-dense column width (unmasked full vst)
_MIN_PALLAS_BYTES = 1 << 20   # below ~1 MiB let XLA fuse the op instead of a kernel


def _tpu_generation():
    """Best-effort TPU generation number (5, 6, 7, ...); None if unknown."""
    try:
        kind = jax.devices()[0].device_kind.lower()   # e.g. "tpu v5 lite", "tpu v6e"
    except Exception:
        return None
    if "tpu" not in kind:
        return None
    m = re.search(r"(\d+)", kind)
    return int(m.group(1)) if m else None


def _chip_tuning():
    """Per-generation tile budget and bf16-compute capability.

    Returns (pair_bytes, native_bf16).  `pair_bytes` is the target byte size of
    ONE (input tile + output tile) pair; double-buffering makes the VMEM
    footprint 2x that, which stays inside every generation's default scoped
    VMEM (v5e 16 MiB, v6e 32 MiB, v7x 32-of-64 MiB).
    """
    gen = _tpu_generation()
    if gen is None or gen <= 5:
        # v5e (or unknown chip): conservative 4 MiB pair, no native bf16 VPU/EUP.
        return 4 << 20, False
    # v6e / v7x: 8 MiB pair (16 MiB double-buffered), native bf16 compute.
    return 8 << 20, True


def _make_elementwise_kernel(fn, compute_dtype):
    """Kernel: apply `fn` elementwise to the current (block_rows, cols) tile."""
    def kernel(x_ref, o_ref):
        x = x_ref[...]
        if compute_dtype is not None:
            # v5e VPU/EUP have no bf16 path: compute in f32, downcast on store.
            x = x.astype(compute_dtype)
        o_ref[...] = fn(x).astype(o_ref.dtype)
    return kernel


def _elementwise_pallas(fn, x):
    """Apply `fn` to `x`, using a Pallas kernel when it is profitable.

    Pallas path requirements: element count is a multiple of 128, tensor is at
    least ~1 MiB, and `fn` preserves shape.  Anything else falls back to plain
    JAX (which XLA fuses / handles optimally and preserves exact semantics).

    NOTE: the flatten+tile scheme silently assumes `fn` is per-element
    independent (no reductions / normalization / position-dependent masks).
    """
    total = x.size
    nbytes = total * jnp.dtype(x.dtype).itemsize

    # Tiny tensors (all of this VAE's Lambdas), empty tensors, or lane-ragged
    # sizes: plain JAX.  XLA fuses the elementwise op into its producer, so
    # this avoids a kernel launch, an extra HBM round trip, and any pad/slice
    # copies that a padded Pallas path would need.
    if total == 0 or nbytes < _MIN_PALLAS_BYTES or total % _LANE != 0:
        return fn(x)

    # Shape-changing / non-elementwise funcs: keep exact Lambda semantics via
    # plain JAX rather than a (wrong) tiled elementwise kernel.
    out_aval_full = jax.eval_shape(fn, jax.ShapeDtypeStruct(x.shape, x.dtype))
    if out_aval_full.shape != x.shape:
        return fn(x)
    out_dtype = out_aval_full.dtype

    # Lane-dense column width: largest multiple of 128 (<=1024) dividing total,
    # so the reshape is free and no padding / tail handling is ever required.
    cols = next(c for c in (_MAX_COLS, 512, 256, _LANE) if total % c == 0)
    rows = total // cols
    x2d = x.reshape(rows, cols)

    pair_bytes, native_bf16 = _chip_tuning()

    # Sub-32-bit float inputs: f32 compute only where the VPU/EUP need it (v5e).
    compute_dtype = None
    if (jnp.issubdtype(x.dtype, jnp.floating)
            and jnp.dtype(x.dtype).itemsize < 4
            and not native_bf16):
        compute_dtype = jnp.float32

    itm_in = jnp.dtype(x.dtype).itemsize
    itm_out = jnp.dtype(out_dtype).itemsize

    # Largest row-tile within the per-generation VMEM budget (multiple of 8).
    max_block_rows = max(8, (pair_bytes // (cols * (itm_in + itm_out))) // 8 * 8)
    # Always give the grid at least 2 blocks so dimension_semantics=("parallel",)
    # actually shards across both TensorCores on v7x (one extra ~0.35 us grid
    # step is noise on the single-TC v5e/v6e).
    two_way_rows = max(8, ((rows + 1) // 2 + 7) // 8 * 8)
    block_rows = min(max_block_rows, two_way_rows)
    grid = (pl.cdiv(rows, block_rows),)

    # Same dtype -> let XLA reuse the intermediate input slab for the output.
    io_aliases = {0: 0} if jnp.dtype(out_dtype) == jnp.dtype(x.dtype) else {}

    # Advisory cost hint (1 read + 1 write, exp-style transcendental budget).
    cost_estimate = pl.CostEstimate(
        flops=2 * total,
        transcendentals=total,
        bytes_accessed=total * (itm_in + itm_out),
    )

    y2d = pl.pallas_call(
        _make_elementwise_kernel(fn, compute_dtype),
        out_shape=jax.ShapeDtypeStruct((rows, cols), out_dtype),
        grid=grid,
        in_specs=[pl.BlockSpec((block_rows, cols), lambda i: (i, 0))],
        out_specs=pl.BlockSpec((block_rows, cols), lambda i: (i, 0)),
        input_output_aliases=io_aliases,
        compiler_params=pltpu.CompilerParams(
            dimension_semantics=("parallel",)),
        cost_estimate=cost_estimate,
    )(x2d)

    return y2d.reshape(x.shape)


class PallasLambda:
    """JAX/Pallas port of the PyTorch `Lambda(func)` module.

    - `func`:     optional jnp-traceable function.  Elementwise,
                  shape-preserving funcs on >=1 MiB lane-friendly tensors are
                  traced INTO a Pallas kernel; everything else (tiny tensors,
                  ragged sizes, shape-changing funcs) runs as plain JAX so the
                  original `Lambda` semantics are preserved exactly.
    - `out_view`: optional callable mapping the input shape to an output
                  shape, mirroring PyTorch `.view(...)`-style Lambdas
                  (e.g. `lambda s: (s[0], -1)` for the VAE flatten Lambda).
    """
    # TODO(synk): funcs that reduce/normalize across axes have no generic
    # tiled Pallas path here; they (and shape-changing funcs) fall back to
    # plain JAX, which matches the reference semantics.

    def __init__(self, func=None, out_view=None):
        self.func = func
        self.out_view = out_view

    def __call__(self, x):
        if self.func is None:
            y = x  # identity data path: skip the kernel entirely
        else:
            y = _elementwise_pallas(self.func, x)
        if self.out_view is not None:
            # torch.Tensor.view is a zero-compute metadata op -> plain-JAX glue.
            y = y.reshape(self.out_view(x.shape))
        return y


if __name__ == "__main__":
    key = jax.random.PRNGKey(0)
    k0, k1, k2 = jax.random.split(key, 3)

    # Small NCHW input consistent with a VAE conv feature map.
    x = jax.random.normal(k0, (2, 4, 16, 16), dtype=jnp.float32)

    # 1) Flatten Lambda (PyTorch: Lambda(lambda x: x.view(x.size(0), -1))).
    #    View-only -> no Pallas call, no HBM round trip.
    flatten_lambda = PallasLambda(out_view=lambda s: (s[0], -1))
    y_flat = jax.block_until_ready(flatten_lambda(x))
    assert y_flat.shape == (2, 4 * 16 * 16), y_flat.shape
    assert jnp.array_equal(y_flat, x.reshape(2, -1)), "flatten Lambda mismatch"

    # 2) Small elementwise Lambda (PyTorch: Lambda(lambda x: torch.exp(0.5*x))).
    #    Below the 1 MiB threshold -> fused plain-JAX bypass.
    ew_lambda = PallasLambda(func=lambda t: jnp.exp(0.5 * t))
    y_ew = jax.block_until_ready(ew_lambda(x))
    assert y_ew.shape == x.shape
    assert jnp.allclose(y_ew, jnp.exp(0.5 * x), atol=1e-6, rtol=1e-5), \
        "small elementwise Lambda mismatch"

    # 3) Larger feature map exercises the actual Pallas kernel path
    #    (2 MiB f32, element count a multiple of 1024 -> lane-dense slab).
    xb = jax.random.normal(k1, (8, 64, 32, 32), dtype=jnp.float32)
    y_big = jax.block_until_ready(ew_lambda(xb))
    assert y_big.shape == xb.shape
    assert jnp.allclose(y_big, jnp.exp(0.5 * xb), atol=1e-6, rtol=1e-5), \
        "Pallas elementwise Lambda mismatch"

    # 4) bf16 input on the Pallas path: native bf16 compute on v6e/v7x,
    #    f32-compute / downcast-on-store on v5e.
    xbf = xb.astype(jnp.bfloat16)
    ybf = jax.block_until_ready(ew_lambda(xbf))
    assert ybf.dtype == jnp.bfloat16
    assert jnp.allclose(ybf.astype(jnp.float32),
                        jnp.exp(0.5 * xbf.astype(jnp.float32)),
                        atol=3e-2, rtol=3e-2), "bf16 elementwise Lambda mismatch"

    # 5) Ragged shape falls back to plain JAX (no pad/slice extra HBM passes).
    x3 = jax.random.normal(k2, (2, 3, 7, 5), dtype=jnp.float32)
    aff_lambda = PallasLambda(func=lambda t: 2.0 * t + 1.0)
    y3 = jax.block_until_ready(aff_lambda(x3))
    assert y3.shape == x3.shape
    assert jnp.allclose(y3, 2.0 * x3 + 1.0, atol=1e-6, rtol=1e-6), \
        "ragged elementwise Lambda mismatch"

    print("KERNEL_OK")
</pallas_src>

<mosaic_0001>
module attributes {stable_mosaic.version = 11 : i64} {
  func.func @kernel(%arg0: i32, %arg1: memref<256x1024xf32, #tpu.memory_space<vmem>>, %arg2: memref<256x1024xf32, #tpu.memory_space<vmem>>) attributes {dimension_semantics = [#tpu.dimension_semantics<parallel>], iteration_bounds = array<i64: 2>, scalar_prefetch = 0 : i64, scratch_operands = 0 : i64, tpu.core_type = #tpu.core_type<tc>, window_params = [{transform_indices = @transform_0, window_bounds = array<i64: 256, 1024>}, {transform_indices = @transform_1, window_bounds = array<i64: 256, 1024>}]} {
    %c0 = arith.constant 0 : index
    %c0_0 = arith.constant 0 : index
    %0 = vector.load %arg1[%c0, %c0_0] : memref<256x1024xf32, #tpu.memory_space<vmem>>, vector<256x1024xf32>
    %cst = arith.constant 5.000000e-01 : f32
    %1 = vector.broadcast %cst : f32 to vector<256x1024xf32>
    %2 = arith.mulf %1, %0 : vector<256x1024xf32>
    %3 = math.exp %2 : vector<256x1024xf32>
    %c0_1 = arith.constant 0 : index
    %c0_2 = arith.constant 0 : index
    %4 = vector.load %arg2[%c0_1, %c0_2] : memref<256x1024xf32, #tpu.memory_space<vmem>>, vector<256x1024xf32>
    tpu.vector_store %arg2[%c0_1, %c0_2], %3 {strides = array<i32>} : memref<256x1024xf32, #tpu.memory_space<vmem>>, vector<256x1024xf32>,
    return
  }
  func.func @transform_0(%arg0: i32) -> (i32, i32) {
    %c0_i32 = arith.constant 0 : i32
    %c0_i32_0 = arith.constant 0 : i32
    return %arg0, %c0_i32 : i32, i32
  }
  func.func @transform_1(%arg0: i32) -> (i32, i32) {
    %c0_i32 = arith.constant 0 : i32
    %c0_i32_0 = arith.constant 0 : i32
    return %arg0, %c0_i32 : i32, i32
  }
}

</mosaic_0001>

<llo_original>
// kernel: tpu_custom_call.1
$region0: #{tpu_custom_call.1}
  #allocation0 [shape = 'u32[]', space=smem, size = 0x4, offset = 0x4, fixed_abs, tag = 'smem constant byte address 0x4 - core index']
  #allocation1 [shape = 'u32[144,128]{1,0:T(1,128)}', space=vmem, size = 0x12000, scoped, tag = 'internal scratch']
  %s0 = inlined_call_operand.hbm [shape: f32[512,1024], index: 0, kind: input, shape index: {}, may-alias: {0,1}]
  %s1 = inlined_call_operand.hbm [shape: f32[512,1024], index: 1, kind: output, shape index: {}, may-alias: {0,1}]
  %s2 = sld [smem:[#allocation0]]
  $region41: #{tpu_custom_call.1} parent=0
    _
  %s4 = ssub.s32 1, %s2
  %s5 = scalar_select 0, %s4, %s2
  $region1: #{tpu_custom_call.1} parent=0
    #allocation2 [shape = 'u8[2097152]{0}', space=vmem, size = 0x200000, scoped, tag = 'input window, operand 0']
    #allocation3 [shape = 's32[2]{0}', space=sflag, size = 0x8, scoped, tag = 'scoped memory for tpu_custom_call.1']
    #allocation4 [shape = 's32[2]{0}', space=sflag, size = 0x8, scoped, tag = 'scoped memory for tpu_custom_call.1']
    #allocation5 [shape = 'u8[2097152]{0}', space=vmem, size = 0x200000, scoped, tag = 'output window, operand 0']
    %6 = vsyncpa [#allocation3], 0
    %s7 = scalar_lea.sflag [#allocation3], 1
    %8 = vsyncpa %s7, 0
    %9 = vsyncpa [#allocation4], 0
    %s10 = scalar_lea.sflag [#allocation4], 1
    %11 = vsyncpa %s10, 0
    loop: start=0, step=1, limit=4
    $region2: #{tpu_custom_call.1} parent=1 // loop_pre_header
      _
    $region3: #{tpu_custom_call.1} parent=1 // loop_header
      %s13 = sphi 0, %s17
      %p14 = scmp.ge.s32.totalorder %s13, 4
      %s23 = sphi 0, %s25
      %s26 = sphi 0, %s23
      %s27 = sphi 0, %s26
      %s43 = sphi 0, %s27
      %s49 = sphi 0, %s51
      %s52 = sphi 0, %s49
      %s53 = sphi 0, %s52
      %s69 = sphi 0, %s53
    $region4: #{tpu_custom_call.1} parent=1 // loop_header_branch
      %16 = sbr.rel (%p14) target = $region8
    $region5: #{tpu_custom_call.1} parent=1 // loop_body
      %s18 = ssub.s32 %s13, 1
      %s19 = ssub.s32 %s13, 2
      %s20 = sadd.s32 %s13, 1
      %s21 = ssub.s32 %s13, %s20
      %p22 = scmp.eq.s32.totalorder %s21, 0
      %s24 = sadd.s32 %s23, 1
      %s25 = scalar_select %p22, %s23, %s24
      %p28 = pneg %p22
      %p29 = scmp.eq.s32.totalorder %s13, 1
      %p30 = por %p28, %p29
      %p31 = scmp.ne.s32.totalorder %s23, %s26
      %p32 = scmp.eq.s32.totalorder %s13, 0
      %p33 = por %p31, %p32
      %p34 = scmp.ne.s32.totalorder %s23, %s26
      %p35 = scmp.eq.s32.totalorder %s18, 1
      %p36 = por %p34, %p35
      %p37 = scmp.ne.s32.totalorder %s26, %s27
      %p38 = scmp.eq.s32.totalorder %s18, 0
      %p39 = por %p37, %p38
      %p40 = scmp.ne.s32.totalorder %s26, %s27
      %p41 = scmp.eq.s32.totalorder %s19, 1
      %p42 = por %p40, %p41
      %p44 = scmp.ne.s32.totalorder %s27, %s43
      %p45 = scmp.eq.s32.totalorder %s19, 0
      %p46 = por %p44, %p45
      %s47 = ssub.s32 %s13, %s20
      %p48 = scmp.eq.s32.totalorder %s47, 0
      %s50 = sadd.s32 %s49, 1
      %s51 = scalar_select %p48, %s49, %s50
      %p54 = pneg %p48
      %p55 = scmp.eq.s32.totalorder %s13, 1
      %p56 = por %p54, %p55
      %p57 = scmp.ne.s32.totalorder %s49, %s52
      %p58 = scmp.eq.s32.totalorder %s13, 0
      %p59 = por %p57, %p58
      %p60 = scmp.ne.s32.totalorder %s49, %s52
      %p61 = scmp.eq.s32.totalorder %s18, 1
      %p62 = por %p60, %p61
      %p63 = scmp.ne.s32.totalorder %s52, %s53
      %p64 = scmp.eq.s32.totalorder %s18, 0
      %p65 = por %p63, %p64
      %p66 = scmp.ne.s32.totalorder %s52, %s53
      %p67 = scmp.eq.s32.totalorder %s19, 1
      %p68 = por %p66, %p67
      %p70 = scmp.ne.s32.totalorder %s53, %s69
      %p71 = scmp.eq.s32.totalorder %s19, 0
      %p72 = por %p70, %p71
      %p73 = scmp.le.s32.totalorder 1, %s13
      %p74 = scmp.lt.s32.totalorder %s13, 3
      %p75 = pnand %p73, %p74
      %p76 = pneg %p75
      // Predicated region
      $region9: #{tpu_custom_call.1} parent=5 // pred_check
        _
      $region10: #{tpu_custom_call.1} parent=5 // pred_check_branch
        %78 = sbr.rel (%p75) target = $region12
      $region11: #{tpu_custom_call.1} parent=5 // pred_region
        %s79 = ssub.s32 %s13, 1
      $region12: #{tpu_custom_call.1} parent=5 // pred_fallthru
        _
      %p80 = scmp.lt.s32.totalorder %s13, 2
      // Predicated region
      $region13: #{tpu_custom_call.1} parent=5 // pred_check
        %p81 = pneg %p80
      $region14: #{tpu_custom_call.1} parent=5 // pred_check_branch
        %83 = sbr.rel (%p81) target = $region16
      $region15: #{tpu_custom_call.1} parent=5 // pred_region
        // Predicated region
        $region17: #{tpu_custom_call.1} parent=15 // pred_check
          %p84 = pneg %p33
        $region18: #{tpu_custom_call.1} parent=15 // pred_check_branch
          %86 = sbr.rel (%p84) target = $region20
        $region19: #{tpu_custom_call.1} parent=15 // pred_region
          %s87 = sand.u32 %s23, 1
          %s88 = scalar_lea.sflag [#allocation3], %s87
          %s89 = sand.u32 %s23, 1
          %s90 = smul.addr %s89, 2048
          %s91 = scalar_lea.vmem [#allocation2], %s90
          %s92 = smul.u32 32, %s13
          %s94 = ssub.s32 32768, 32768
          %95 = vsyncadd %s88, %s94
          %s96 = smul.addr %s92, 8
          %s97 = smul.addr %s96, 128
          %s98 = scalar_lea.hbm %s0, %s97
          %s99 = sshll.u32 %s91, 4
          %s100 = int_to_ptr.vmem [resolvable:$true] %s99
          %105 = dma.hbm_to_vmem [thread:$0]  %s98, 32768, %s100, %s88, 1024, 1024, 64
        $region20: #{tpu_custom_call.1} parent=15 // pred_fallthru
          _
      $region16: #{tpu_custom_call.1} parent=5 // pred_fallthru
        _
      %p106 = scmp.le.s32.totalorder 1, %s13
      %p107 = scmp.lt.s32.totalorder %s13, 3
      %p108 = pnand %p106, %p107
      %p109 = pneg %p108
      // Predicated region
      $region21: #{tpu_custom_call.1} parent=5 // pred_check
        _
      $region22: #{tpu_custom_call.1} parent=5 // pred_check_branch
        %111 = sbr.rel (%p108) target = $region24
      $region23: #{tpu_custom_call.1} parent=5 // pred_region
        %s112 = ssub.s32 %s13, 1
        %s113 = sand.u32 %s26, 1
        %s114 = scalar_lea.sflag [#allocation3], %s113
        %s115 = sand.u32 %s26, 1
        %s116 = smul.addr %s115, 2048
        %s117 = scalar_lea.vmem [#allocation2], %s116
        // Predicated region
        $region25: #{tpu_custom_call.1} parent=23 // pred_check
          %p118 = pneg %p39
        $region26: #{tpu_custom_call.1} parent=23 // pred_check_branch
          %120 = sbr.rel (%p118) target = $region28
        $region27: #{tpu_custom_call.1} parent=23 // pred_region
          %121 = dma.done %s114, 32768
        $region28: #{tpu_custom_call.1} parent=23 // pred_fallthru
          _
        %s122 = sand.u32 %s26, 1
        %s123 = scalar_lea.sflag [#allocation3], %s122
        %s124 = sand.u32 %s26, 1
        %s125 = smul.addr %s124, 2048
        %s126 = scalar_lea.vmem [#allocation2], %s125
        %p127 = pneg %p39
        %p128 = pneg %p36
        %p129 = pneg %p65
        %p130 = pneg %p62
        %s131 = sand.u32 %s52, 1
        %s132 = scalar_lea.sflag [#allocation4], %s131
        %s133 = sand.u32 %s52, 1
        %s134 = smul.addr %s133, 2048
        %s135 = scalar_lea.vmem [#allocation5], %s134
        %s136 = smul.u32 32, %s18
        %s137 = smul.u32 32, %s18
        %v138 = vld [vmem:[%s117] sm:$0xff]
        %v139 = vld [vmem:[%s117 + $0x8] sm:$0xff]
        %v140 = vld [vmem:[%s117 + $0x10] sm:$0xff]
        %v141 = vld [vmem:[%s117 + $0x18] sm:$0xff]
        %v142 = vld [vmem:[%s117 + $0x20] sm:$0xff]
        %v143 = vld [vmem:[%s117 + $0x28] sm:$0xff]
        %v144 = vld [vmem:[%s117 + $0x30] sm:$0xff]
        %v145 = vld [vmem:[%s117 + $0x38] sm:$0xff]
        %v146 = vld [vmem:[%s117 + $0x40] sm:$0xff]
        %v147 = vld [vmem:[%s117 + $0x48] sm:$0xff]
        %v148 = vld [vmem:[%s117 + $0x50] sm:$0xff]
        %v149 = vld [vmem:[%s117 + $0x58] sm:$0xff]
        %v150 = vld [vmem:[%s117 + $0x60] sm:$0xff]
        %v151 = vld [vmem:[%s117 + $0x68] sm:$0xff]
        %v152 = vld [vmem:[%s117 + $0x70] sm:$0xff]
        %v153 = vld [vmem:[%s117 + $0x78] sm:$0xff]
        %v154 = vld [vmem:[%s117 + $0x80] sm:$0xff]
        %v155 = vld [vmem:[%s117 + $0x88] sm:$0xff]
        %v156 = vld [vmem:[%s117 + $0x90] sm:$0xff]
        %v157 = vld [vmem:[%s117 + $0x98] sm:$0xff]
        %v158 = vld [vmem:[%s117 + $0xa0] sm:$0xff]
        %v159 = vld [vmem:[%s117 + $0xa8] sm:$0xff]
        %v160 = vld [vmem:[%s117 + $0xb0] sm:$0xff]
        %v161 = vld [vmem:[%s117 + $0xb8] sm:$0xff]
        %v162 = vld [vmem:[%s117 + $0xc0] sm:$0xff]
        %v163 = vld [vmem:[%s117 + $0xc8] sm:$0xff]
        %v164 = vld [vmem:[%s117 + $0xd0] sm:$0xff]
        %v165 = vld [vmem:[%s117 + $0xd8] sm:$0xff]
        %v166 = vld [vmem:[%s117 + $0xe0] sm:$0xff]
        %v167 = vld [vmem:[%s117 + $0xe8] sm:$0xff]
        %v168 = vld [vmem:[%s117 + $0xf0] sm:$0xff]
        %v169 = vld [vmem:[%s117 + $0xf8] sm:$0xff]
        %v170 = vld [vmem:[%s117 + $0x100] sm:$0xff]
        %v171 = vld [vmem:[%s117 + $0x108] sm:$0xff]
        %v172 = vld [vmem:[%s117 + $0x110] sm:$0xff]
        %v173 = vld [vmem:[%s117 + $0x118] sm:$0xff]
        %v174 = vld [vmem:[%s117 + $0x120] sm:$0xff]
        %v175 = vld [vmem:[%s117 + $0x128] sm:$0xff]
        %v176 = vld [vmem:[%s117 + $0x130] sm:$0xff]
        %v177 = vld [vmem:[%s117 + $0x138] sm:$0xff]
        %v178 = vld [vmem:[%s117 + $0x140] sm:$0xff]
        %v179 = vld [vmem:[%s117 + $0x148] sm:$0xff]
        %v180 = vld [vmem:[%s117 + $0x150] sm:$0xff]
        %v181 = vld [vmem:[%s117 + $0x158] sm:$0xff]
        %v182 = vld [vmem:[%s117 + $0x160] sm:$0xff]
        %v183 = vld [vmem:[%s117 + $0x168] sm:$0xff]
        %v184 = vld [vmem:[%s117 + $0x170] sm:$0xff]
        %v185 = vld [vmem:[%s117 + $0x178] sm:$0xff]
        %v186 = vld [vmem:[%s117 + $0x180] sm:$0xff]
        %v187 = vld [vmem:[%s117 + $0x188] sm:$0xff]
        %v188 = vld [vmem:[%s117 + $0x190] sm:$0xff]
        %v189 = vld [vmem:[%s117 + $0x198] sm:$0xff]
        %v190 = vld [vmem:[%s117 + $0x1a0] sm:$0xff]
        %v191 = vld [vmem:[%s117 + $0x1a8] sm:$0xff]
        %v192 = vld [vmem:[%s117 + $0x1b0] sm:$0xff]
        %v193 = vld [vmem:[%s117 + $0x1b8] sm:$0xff]
        %v194 = vld [vmem:[%s117 + $0x1c0] sm:$0xff]
        %v195 = vld [vmem:[%s117 + $0x1c8] sm:$0xff]
        %v196 = vld [vmem:[%s117 + $0x1d0] sm:$0xff]
        %v197 = vld [vmem:[%s117 + $0x1d8] sm:$0xff]
        %v198 = vld [vmem:[%s117 + $0x1e0] sm:$0xff]
        %v199 = vld [vmem:[%s117 + $0x1e8] sm:$0xff]
        %v200 = vld [vmem:[%s117 + $0x1f0] sm:$0xff]
        %v201 = vld [vmem:[%s117 + $0x1f8] sm:$0xff]
        %v202 = vld [vmem:[%s117 + $0x200] sm:$0xff]
        %v203 = vld [vmem:[%s117 + $0x208] sm:$0xff]
        %v204 = vld [vmem:[%s117 + $0x210] sm:$0xff]
        %v205 = vld [vmem:[%s117 + $0x218] sm:$0xff]
        %v206 = vld [vmem:[%s117 + $0x220] sm:$0xff]
        %v207 = vld [vmem:[%s117 + $0x228] sm:$0xff]
        %v208 = vld [vmem:[%s117 + $0x230] sm:$0xff]
        %v209 = vld [vmem:[%s117 + $0x238] sm:$0xff]
        %v210 = vld [vmem:[%s117 + $0x240] sm:$0xff]
        %v211 = vld [vmem:[%s117 + $0x248] sm:$0xff]
        %v212 = vld [vmem:[%s117 + $0x250] sm:$0xff]
        %v213 = vld [vmem:[%s117 + $0x258] sm:$0xff]
        %v214 = vld [vmem:[%s117 + $0x260] sm:$0xff]
        %v215 = vld [vmem:[%s117 + $0x268] sm:$0xff]
        %v216 = vld [vmem:[%s117 + $0x270] sm:$0xff]
        %v217 = vld [vmem:[%s117 + $0x278] sm:$0xff]
        %v218 = vld [vmem:[%s117 + $0x280] sm:$0xff]
        %v219 = vld [vmem:[%s117 + $0x288] sm:$0xff]
        %v220 = vld [vmem:[%s117 + $0x290] sm:$0xff]
        %v221 = vld [vmem:[%s117 + $0x298] sm:$0xff]
        %v222 = vld [vmem:[%s117 + $0x2a0] sm:$0xff]
        %v223 = vld [vmem:[%s117 + $0x2a8] sm:$0xff]
        %v224 = vld [vmem:[%s117 + $0x2b0] sm:$0xff]
        %v225 = vld [vmem:[%s117 + $0x2b8] sm:$0xff]
        %v226 = vld [vmem:[%s117 + $0x2c0] sm:$0xff]
        %v227 = vld [vmem:[%s117 + $0x2c8] sm:$0xff]
        %v228 = vld [vmem:[%s117 + $0x2d0] sm:$0xff]
        %v229 = vld [vmem:[%s117 + $0x2d8] sm:$0xff]
        %v230 = vld [vmem:[%s117 + $0x2e0] sm:$0xff]
        %v231 = vld [vmem:[%s117 + $0x2e8] sm:$0xff]
        %v232 = vld [vmem:[%s117 + $0x2f0] sm:$0xff]
        %v233 = vld [vmem:[%s117 + $0x2f8] sm:$0xff]
        %v234 = vld [vmem:[%s117 + $0x300] sm:$0xff]
        %v235 = vld [vmem:[%s117 + $0x308] sm:$0xff]
        %v236 = vld [vmem:[%s117 + $0x310] sm:$0xff]
        %v237 = vld [vmem:[%s117 + $0x318] sm:$0xff]
        %v238 = vld [vmem:[%s117 + $0x320] sm:$0xff]
        %v239 = vld [vmem:[%s117 + $0x328] sm:$0xff]
        %v240 = vld [vmem:[%s117 + $0x330] sm:$0xff]
        %v241 = vld [vmem:[%s117 + $0x338] sm:$0xff]
        %v242 = vld [vmem:[%s117 + $0x340] sm:$0xff]
        %v243 = vld [vmem:[%s117 + $0x348] sm:$0xff]
        %v244 = vld [vmem:[%s117 + $0x350] sm:$0xff]
        %v245 = vld [vmem:[%s117 + $0x358] sm:$0xff]
        %v246 = vld [vmem:[%s117 + $0x360] sm:$0xff]
        %v247 = vld [vmem:[%s117 + $0x368] sm:$0xff]
        %v248 = vld [vmem:[%s117 + $0x370] sm:$0xff]
        %v249 = vld [vmem:[%s117 + $0x378] sm:$0xff]
        %v250 = vld [vmem:[%s117 + $0x380] sm:$0xff]
        %v251 = vld [vmem:[%s117 + $0x388] sm:$0xff]
        %v252 = vld [vmem:[%s117 + $0x390] sm:$0xff]
        %v253 = vld [vmem:[%s117 + $0x398] sm:$0xff]
        %v254 = vld [vmem:[%s117 + $0x3a0] sm:$0xff]
        %v255 = vld [vmem:[%s117 + $0x3a8] sm:$0xff]
        %v256 = vld [vmem:[%s117 + $0x3b0] sm:$0xff]
        %v257 = vld [vmem:[%s117 + $0x3b8] sm:$0xff]
        %v258 = vld [vmem:[%s117 + $0x3c0] sm:$0xff]
        %v259 = vld [vmem:[%s117 + $0x3c8] sm:$0xff]
        %v260 = vld [vmem:[%s117 + $0x3d0] sm:$0xff]
        %v261 = vld [vmem:[%s117 + $0x3d8] sm:$0xff]
        %v262 = vld [vmem:[%s117 + $0x3e0] sm:$0xff]
        %v263 = vld [vmem:[%s117 + $0x3e8] sm:$0xff]
        %v264 = vld [vmem:[%s117 + $0x3f0] sm:$0xff]
        %v265 = vld [vmem:[%s117 + $0x3f8] sm:$0xff]
        %v266 = vld [vmem:[%s117 + $0x400] sm:$0xff]
        %v267 = vld [vmem:[%s117 + $0x408] sm:$0xff]
        %v268 = vld [vmem:[%s117 + $0x410] sm:$0xff]
        %v269 = vld [vmem:[%s117 + $0x418] sm:$0xff]
        %v270 = vld [vmem:[%s117 + $0x420] sm:$0xff]
        %v271 = vld [vmem:[%s117 + $0x428] sm:$0xff]
        %v272 = vld [vmem:[%s117 + $0x430] sm:$0xff]
        %v273 = vld [vmem:[%s117 + $0x438] sm:$0xff]
        %v274 = vld [vmem:[%s117 + $0x440] sm:$0xff]
        %v275 = vld [vmem:[%s117 + $0x448] sm:$0xff]
        %v276 = vld [vmem:[%s117 + $0x450] sm:$0xff]
        %v277 = vld [vmem:[%s117 + $0x458] sm:$0xff]
        %v278 = vld [vmem:[%s117 + $0x460] sm:$0xff]
        %v279 = vld [vmem:[%s117 + $0x468] sm:$0xff]
        %v280 = vld [vmem:[%s117 + $0x470] sm:$0xff]
        %v281 = vld [vmem:[%s117 + $0x478] sm:$0xff]
        %v282 = vld [vmem:[%s117 + $0x480] sm:$0xff]
        %v283 = vld [vmem:[%s117 + $0x488] sm:$0xff]
        %v284 = vld [vmem:[%s117 + $0x490] sm:$0xff]
        %v285 = vld [vmem:[%s117 + $0x498] sm:$0xff]
        %v286 = vld [vmem:[%s117 + $0x4a0] sm:$0xff]
        %v287 = vld [vmem:[%s117 + $0x4a8] sm:$0xff]
        %v288 = vld [vmem:[%s117 + $0x4b0] sm:$0xff]
        %v289 = vld [vmem:[%s117 + $0x4b8] sm:$0xff]
        %v290 = vld [vmem:[%s117 + $0x4c0] sm:$0xff]
        %v291 = vld [vmem:[%s117 + $0x4c8] sm:$0xff]
        %v292 = vld [vmem:[%s117 + $0x4d0] sm:$0xff]
        %v293 = vld [vmem:[%s117 + $0x4d8] sm:$0xff]
        %v294 = vld [vmem:[%s117 + $0x4e0] sm:$0xff]
        %v295 = vld [vmem:[%s117 + $0x4e8] sm:$0xff]
        %v296 = vld [vmem:[%s117 + $0x4f0] sm:$0xff]
        %v297 = vld [vmem:[%s117 + $0x4f8] sm:$0xff]
        %v298 = vld [vmem:[%s117 + $0x500] sm:$0xff]
        %v299 = vld [vmem:[%s117 + $0x508] sm:$0xff]
        %v300 = vld [vmem:[%s117 + $0x510] sm:$0xff]
        %v301 = vld [vmem:[%s117 + $0x518] sm:$0xff]
        %v302 = vld [vmem:[%s117 + $0x520] sm:$0xff]
        %v303 = vld [vmem:[%s117 + $0x528] sm:$0xff]
        %v304 = vld [vmem:[%s117 + $0x530] sm:$0xff]
        %v305 = vld [vmem:[%s117 + $0x538] sm:$0xff]
        %v306 = vld [vmem:[%s117 + $0x540] sm:$0xff]
        %v307 = vld [vmem:[%s117 + $0x548] sm:$0xff]
        %v308 = vld [vmem:[%s117 + $0x550] sm:$0xff]
        %v309 = vld [vmem:[%s117 + $0x558] sm:$0xff]
        %v310 = vld [vmem:[%s117 + $0x560] sm:$0xff]
        %v311 = vld [vmem:[%s117 + $0x568] sm:$0xff]
        %v312 = vld [vmem:[%s117 + $0x570] sm:$0xff]
        %v313 = vld [vmem:[%s117 + $0x578] sm:$0xff]
        %v314 = vld [vmem:[%s117 + $0x580] sm:$0xff]
        %v315 = vld [vmem:[%s117 + $0x588] sm:$0xff]
        %v316 = vld [vmem:[%s117 + $0x590] sm:$0xff]
        %v317 = vld [vmem:[%s117 + $0x598] sm:$0xff]
        %v318 = vld [vmem:[%s117 + $0x5a0] sm:$0xff]
        %v319 = vld [vmem:[%s117 + $0x5a8] sm:$0xff]
        %v320 = vld [vmem:[%s117 + $0x5b0] sm:$0xff]
        %v321 = vld [vmem:[%s117 + $0x5b8] sm:$0xff]
        %v322 = vld [vmem:[%s117 + $0x5c0] sm:$0xff]
        %v323 = vld [vmem:[%s117 + $0x5c8] sm:$0xff]
        %v324 = vld [vmem:[%s117 + $0x5d0] sm:$0xff]
        %v325 = vld [vmem:[%s117 + $0x5d8] sm:$0xff]
        %v326 = vld [vmem:[%s117 + $0x5e0] sm:$0xff]
        %v327 = vld [vmem:[%s117 + $0x5e8] sm:$0xff]
        %v328 = vld [vmem:[%s117 + $0x5f0] sm:$0xff]
        %v329 = vld [vmem:[%s117 + $0x5f8] sm:$0xff]
        %v330 = vld [vmem:[%s117 + $0x600] sm:$0xff]
        %v331 = vld [vmem:[%s117 + $0x608] sm:$0xff]
        %v332 = vld [vmem:[%s117 + $0x610] sm:$0xff]
        %v333 = vld [vmem:[%s117 + $0x618] sm:$0xff]
        %v334 = vld [vmem:[%s117 + $0x620] sm:$0xff]
        %v335 = vld [vmem:[%s117 + $0x628] sm:$0xff]
        %v336 = vld [vmem:[%s117 + $0x630] sm:$0xff]
        %v337 = vld [vmem:[%s117 + $0x638] sm:$0xff]
        %v338 = vld [vmem:[%s117 + $0x640] sm:$0xff]
        %v339 = vld [vmem:[%s117 + $0x648] sm:$0xff]
        %v340 = vld [vmem:[%s117 + $0x650] sm:$0xff]
        %v341 = vld [vmem:[%s117 + $0x658] sm:$0xff]
        %v342 = vld [vmem:[%s117 + $0x660] sm:$0xff]
        %v343 = vld [vmem:[%s117 + $0x668] sm:$0xff]
        %v344 = vld [vmem:[%s117 + $0x670] sm:$0xff]
        %v345 = vld [vmem:[%s117 + $0x678] sm:$0xff]
        %v346 = vld [vmem:[%s117 + $0x680] sm:$0xff]
        %v347 = vld [vmem:[%s117 + $0x688] sm:$0xff]
        %v348 = vld [vmem:[%s117 + $0x690] sm:$0xff]
        %v349 = vld [vmem:[%s117 + $0x698] sm:$0xff]
        %v350 = vld [vmem:[%s117 + $0x6a0] sm:$0xff]
        %v351 = vld [vmem:[%s117 + $0x6a8] sm:$0xff]
        %v352 = vld [vmem:[%s117 + $0x6b0] sm:$0xff]
        %v353 = vld [vmem:[%s117 + $0x6b8] sm:$0xff]
        %v354 = vld [vmem:[%s117 + $0x6c0] sm:$0xff]
        %v355 = vld [vmem:[%s117 + $0x6c8] sm:$0xff]
        %v356 = vld [vmem:[%s117 + $0x6d0] sm:$0xff]
        %v357 = vld [vmem:[%s117 + $0x6d8] sm:$0xff]
        %v358 = vld [vmem:[%s117 + $0x6e0] sm:$0xff]
        %v359 = vld [vmem:[%s117 + $0x6e8] sm:$0xff]
        %v360 = vld [vmem:[%s117 + $0x6f0] sm:$0xff]
        %v361 = vld [vmem:[%s117 + $0x6f8] sm:$0xff]
        %v362 = vld [vmem:[%s117 + $0x700] sm:$0xff]
        %v363 = vld [vmem:[%s117 + $0x708] sm:$0xff]
        %v364 = vld [vmem:[%s117 + $0x710] sm:$0xff]
        %v365 = vld [vmem:[%s117 + $0x718] sm:$0xff]
        %v366 = vld [vmem:[%s117 + $0x720] sm:$0xff]
        %v367 = vld [vmem:[%s117 + $0x728] sm:$0xff]
        %v368 = vld [vmem:[%s117 + $0x730] sm:$0xff]
        %v369 = vld [vmem:[%s117 + $0x738] sm:$0xff]
        %v370 = vld [vmem:[%s117 + $0x740] sm:$0xff]
        %v371 = vld [vmem:[%s117 + $0x748] sm:$0xff]
        %v372 = vld [vmem:[%s117 + $0x750] sm:$0xff]
        %v373 = vld [vmem:[%s117 + $0x758] sm:$0xff]
        %v374 = vld [vmem:[%s117 + $0x760] sm:$0xff]
        %v375 = vld [vmem:[%s117 + $0x768] sm:$0xff]
        %v376 = vld [vmem:[%s117 + $0x770] sm:$0xff]
        %v377 = vld [vmem:[%s117 + $0x778] sm:$0xff]
        %v378 = vld [vmem:[%s117 + $0x780] sm:$0xff]
        %v379 = vld [vmem:[%s117 + $0x788] sm:$0xff]
        %v380 = vld [vmem:[%s117 + $0x790] sm:$0xff]
        %v381 = vld [vmem:[%s117 + $0x798] sm:$0xff]
        %v382 = vld [vmem:[%s117 + $0x7a0] sm:$0xff]
        %v383 = vld [vmem:[%s117 + $0x7a8] sm:$0xff]
        %v384 = vld [vmem:[%s117 + $0x7b0] sm:$0xff]
        %v385 = vld [vmem:[%s117 + $0x7b8] sm:$0xff]
        %v386 = vld [vmem:[%s117 + $0x7c0] sm:$0xff]
        %v387 = vld [vmem:[%s117 + $0x7c8] sm:$0xff]
        %v388 = vld [vmem:[%s117 + $0x7d0] sm:$0xff]
        %v389 = vld [vmem:[%s117 + $0x7d8] sm:$0xff]
        %v390 = vld [vmem:[%s117 + $0x7e0] sm:$0xff]
        %v391 = vld [vmem:[%s117 + $0x7e8] sm:$0xff]
        %v392 = vld [vmem:[%s117 + $0x7f0] sm:$0xff]
        %v393 = vld [vmem:[%s117 + $0x7f8] sm:$0xff]
        %v394 = vmul.f32 %v138, 0.5
        %v395 = vmul.f32 %v139, 0.5
        %v396 = vmul.f32 %v140, 0.5
        %v397 = vmul.f32 %v141, 0.5
        %v398 = vmul.f32 %v142, 0.5
        %v399 = vmul.f32 %v143, 0.5
        %v400 = vmul.f32 %v144, 0.5
        %v401 = vmul.f32 %v145, 0.5
        %v402 = vmul.f32 %v146, 0.5
        %v403 = vmul.f32 %v147, 0.5
        %v404 = vmul.f32 %v148, 0.5
        %v405 = vmul.f32 %v149, 0.5
        %v406 = vmul.f32 %v150, 0.5
        %v407 = vmul.f32 %v151, 0.5
        %v408 = vmul.f32 %v152, 0.5
        %v409 = vmul.f32 %v153, 0.5
        %v410 = vmul.f32 %v154, 0.5
        %v411 = vmul.f32 %v155, 0.5
        %v412 = vmul.f32 %v156, 0.5
        %v413 = vmul.f32 %v157, 0.5
        %v414 = vmul.f32 %v158, 0.5
        %v415 = vmul.f32 %v159, 0.5
        %v416 = vmul.f32 %v160, 0.5
        %v417 = vmul.f32 %v161, 0.5
        %v418 = vmul.f32 %v162, 0.5
        %v419 = vmul.f32 %v163, 0.5
        %v420 = vmul.f32 %v164, 0.5
        %v421 = vmul.f32 %v165, 0.5
        %v422 = vmul.f32 %v166, 0.5
        %v423 = vmul.f32 %v167, 0.5
        %v424 = vmul.f32 %v168, 0.5
        %v425 = vmul.f32 %v169, 0.5
        %v426 = vmul.f32 %v170, 0.5
        %v427 = vmul.f32 %v171, 0.5
        %v428 = vmul.f32 %v172, 0.5
        %v429 = vmul.f32 %v173, 0.5
        %v430 = vmul.f32 %v174, 0.5
        %v431 = vmul.f32 %v175, 0.5
        %v432 = vmul.f32 %v176, 0.5
        %v433 = vmul.f32 %v177, 0.5
        %v434 = vmul.f32 %v178, 0.5
        %v435 = vmul.f32 %v179, 0.5
        %v436 = vmul.f32 %v180, 0.5
        %v437 = vmul.f32 %v181, 0.5
        %v438 = vmul.f32 %v182, 0.5
        %v439 = vmul.f32 %v183, 0.5
        %v440 = vmul.f32 %v184, 0.5
        %v441 = vmul.f32 %v185, 0.5
        %v442 = vmul.f32 %v186, 0.5
        %v443 = vmul.f32 %v187, 0.5
        %v444 = vmul.f32 %v188, 0.5
        %v445 = vmul.f32 %v189, 0.5
        %v446 = vmul.f32 %v190, 0.5
        %v447 = vmul.f32 %v191, 0.5
        %v448 = vmul.f32 %v192, 0.5
        %v449 = vmul.f32 %v193, 0.5
        %v450 = vmul.f32 %v194, 0.5
        %v451 = vmul.f32 %v195, 0.5
        %v452 = vmul.f32 %v196, 0.5
        %v453 = vmul.f32 %v197, 0.5
        %v454 = vmul.f32 %v198, 0.5
        %v455 = vmul.f32 %v199, 0.5
        %v456 = vmul.f32 %v200, 0.5
        %v457 = vmul.f32 %v201, 0.5
        %v458 = vmul.f32 %v202, 0.5
        %v459 = vmul.f32 %v203, 0.5
        %v460 = vmul.f32 %v204, 0.5
        %v461 = vmul.f32 %v205, 0.5
        %v462 = vmul.f32 %v206, 0.5
        %v463 = vmul.f32 %v207, 0.5
        %v464 = vmul.f32 %v208, 0.5
        %v465 = vmul.f32 %v209, 0.5
        %v466 = vmul.f32 %v210, 0.5
        %v467 = vmul.f32 %v211, 0.5
        %v468 = vmul.f32 %v212, 0.5
        %v469 = vmul.f32 %v213, 0.5
        %v470 = vmul.f32 %v214, 0.5
        %v471 = vmul.f32 %v215, 0.5
        %v472 = vmul.f32 %v216, 0.5
        %v473 = vmul.f32 %v217, 0.5
        %v474 = vmul.f32 %v218, 0.5
        %v475 = vmul.f32 %v219, 0.5
        %v476 = vmul.f32 %v220, 0.5
        %v477 = vmul.f32 %v221, 0.5
        %v478 = vmul.f32 %v222, 0.5
        %v479 = vmul.f32 %v223, 0.5
        %v480 = vmul.f32 %v224, 0.5
        %v481 = vmul.f32 %v225, 0.5
        %v482 = vmul.f32 %v226, 0.5
        %v483 = vmul.f32 %v227, 0.5
        %v484 = vmul.f32 %v228, 0.5
        %v485 = vmul.f32 %v229, 0.5
        %v486 = vmul.f32 %v230, 0.5
        %v487 = vmul.f32 %v231, 0.5
        %v488 = vmul.f32 %v232, 0.5
        %v489 = vmul.f32 %v233, 0.5
        %v490 = vmul.f32 %v234, 0.5
        %v491 = vmul.f32 %v235, 0.5
        %v492 = vmul.f32 %v236, 0.5
        %v493 = vmul.f32 %v237, 0.5
        %v494 = vmul.f32 %v238, 0.5
        %v495 = vmul.f32 %v239, 0.5
        %v496 = vmul.f32 %v240, 0.5
        %v497 = vmul.f32 %v241, 0.5
        %v498 = vmul.f32 %v242, 0.5
        %v499 = vmul.f32 %v243, 0.5
        %v500 = vmul.f32 %v244, 0.5
        %v501 = vmul.f32 %v245, 0.5
        %v502 = vmul.f32 %v246, 0.5
        %v503 = vmul.f32 %v247, 0.5
        %v504 = vmul.f32 %v248, 0.5
        %v505 = vmul.f32 %v249, 0.5
        %v506 = vmul.f32 %v250, 0.5
        %v507 = vmul.f32 %v251, 0.5
        %v508 = vmul.f32 %v252, 0.5
        %v509 = vmul.f32 %v253, 0.5
        %v510 = vmul.f32 %v254, 0.5
        %v511 = vmul.f32 %v255, 0.5
        %v512 = vmul.f32 %v256, 0.5
        %v513 = vmul.f32 %v257, 0.5
        %v514 = vmul.f32 %v258, 0.5
        %v515 = vmul.f32 %v259, 0.5
        %v516 = vmul.f32 %v260, 0.5
        %v517 = vmul.f32 %v261, 0.5
        %v518 = vmul.f32 %v262, 0.5
        %v519 = vmul.f32 %v263, 0.5
        %v520 = vmul.f32 %v264, 0.5
        %v521 = vmul.f32 %v265, 0.5
        %v522 = vmul.f32 %v266, 0.5
        %v523 = vmul.f32 %v267, 0.5
        %v524 = vmul.f32 %v268, 0.5
        %v525 = vmul.f32 %v269, 0.5
        %v526 = vmul.f32 %v270, 0.5
        %v527 = vmul.f32 %v271, 0.5
        %v528 = vmul.f32 %v272, 0.5
        %v529 = vmul.f32 %v273, 0.5
        %v530 = vmul.f32 %v274, 0.5
        %v531 = vmul.f32 %v275, 0.5
        %v532 = vmul.f32 %v276, 0.5
        %v533 = vmul.f32 %v277, 0.5
        %v534 = vmul.f32 %v278, 0.5
        %v535 = vmul.f32 %v279, 0.5
        %v536 = vmul.f32 %v280, 0.5
        %v537 = vmul.f32 %v281, 0.5
        %v538 = vmul.f32 %v282, 0.5
        %v539 = vmul.f32 %v283, 0.5
        %v540 = vmul.f32 %v284, 0.5
        %v541 = vmul.f32 %v285, 0.5
        %v542 = vmul.f32 %v286, 0.5
        %v543 = vmul.f32 %v287, 0.5
        %v544 = vmul.f32 %v288, 0.5
        %v545 = vmul.f32 %v289, 0.5
        %v546 = vmul.f32 %v290, 0.5
        %v547 = vmul.f32 %v291, 0.5
        %v548 = vmul.f32 %v292, 0.5
        %v549 = vmul.f32 %v293, 0.5
        %v550 = vmul.f32 %v294, 0.5
        %v551 = vmul.f32 %v295, 0.5
        %v552 = vmul.f32 %v296, 0.5
        %v553 = vmul.f32 %v297, 0.5
        %v554 = vmul.f32 %v298, 0.5
        %v555 = vmul.f32 %v299, 0.5
        %v556 = vmul.f32 %v300, 0.5
        %v557 = vmul.f32 %v301, 0.5
        %v558 = vmul.f32 %v302, 0.5
        %v559 = vmul.f32 %v303, 0.5
        %v560 = vmul.f32 %v304, 0.5
        %v561 = vmul.f32 %v305, 0.5
        %v562 = vmul.f32 %v306, 0.5
        %v563 = vmul.f32 %v307, 0.5
        %v564 = vmul.f32 %v308, 0.5
        %v565 = vmul.f32 %v309, 0.5
        %v566 = vmul.f32 %v310, 0.5
        %v567 = vmul.f32 %v311, 0.5
        %v568 = vmul.f32 %v312, 0.5
        %v569 = vmul.f32 %v313, 0.5
        %v570 = vmul.f32 %v314, 0.5
        %v571 = vmul.f32 %v315, 0.5
        %v572 = vmul.f32 %v316, 0.5
        %v573 = vmul.f32 %v317, 0.5
        %v574 = vmul.f32 %v318, 0.5
        %v575 = vmul.f32 %v319, 0.5
        %v576 = vmul.f32 %v320, 0.5
        %v577 = vmul.f32 %v321, 0.5
        %v578 = vmul.f32 %v322, 0.5
        %v579 = vmul.f32 %v323, 0.5
        %v580 = vmul.f32 %v324, 0.5
        %v581 = vmul.f32 %v325, 0.5
        %v582 = vmul.f32 %v326, 0.5
        %v583 = vmul.f32 %v327, 0.5
        %v584 = vmul.f32 %v328, 0.5
        %v585 = vmul.f32 %v329, 0.5
        %v586 = vmul.f32 %v330, 0.5
        %v587 = vmul.f32 %v331, 0.5
        %v588 = vmul.f32 %v332, 0.5
        %v589 = vmul.f32 %v333, 0.5
        %v590 = vmul.f32 %v334, 0.5
        %v591 = vmul.f32 %v335, 0.5
        %v592 = vmul.f32 %v336, 0.5
        %v593 = vmul.f32 %v337, 0.5
        %v594 = vmul.f32 %v338, 0.5
        %v595 = vmul.f32 %v339, 0.5
        %v596 = vmul.f32 %v340, 0.5
        %v597 = vmul.f32 %v341, 0.5
        %v598 = vmul.f32 %v342, 0.5
        %v599 = vmul.f32 %v343, 0.5
        %v600 = vmul.f32 %v344, 0.5
        %v601 = vmul.f32 %v345, 0.5
        %v602 = vmul.f32 %v346, 0.5
        %v603 = vmul.f32 %v347, 0.5
        %v604 = vmul.f32 %v348, 0.5
        %v605 = vmul.f32 %v349, 0.5
        %v606 = vmul.f32 %v350, 0.5
        %v607 = vmul.f32 %v351, 0.5
        %v608 = vmul.f32 %v352, 0.5
        %v609 = vmul.f32 %v353, 0.5
        %v610 = vmul.f32 %v354, 0.5
        %v611 = vmul.f32 %v355, 0.5
        %v612 = vmul.f32 %v356, 0.5
        %v613 = vmul.f32 %v357, 0.5
        %v614 = vmul.f32 %v358, 0.5
        %v615 = vmul.f32 %v359, 0.5
        %v616 = vmul.f32 %v360, 0.5
        %v617 = vmul.f32 %v361, 0.5
        %v618 = vmul.f32 %v362, 0.5
        %v619 = vmul.f32 %v363, 0.5
        %v620 = vmul.f32 %v364, 0.5
        %v621 = vmul.f32 %v365, 0.5
        %v622 = vmul.f32 %v366, 0.5
        %v623 = vmul.f32 %v367, 0.5
        %v624 = vmul.f32 %v368, 0.5
        %v625 = vmul.f32 %v369, 0.5
        %v626 = vmul.f32 %v370, 0.5
        %v627 = vmul.f32 %v371, 0.5
        %v628 = vmul.f32 %v372, 0.5
        %v629 = vmul.f32 %v373, 0.5
        %v630 = vmul.f32 %v374, 0.5
        %v631 = vmul.f32 %v375, 0.5
        %v632 = vmul.f32 %v376, 0.5
        %v633 = vmul.f32 %v377, 0.5
        %v634 = vmul.f32 %v378, 0.5
        %v635 = vmul.f32 %v379, 0.5
        %v636 = vmul.f32 %v380, 0.5
        %v637 = vmul.f32 %v381, 0.5
        %v638 = vmul.f32 %v382, 0.5
        %v639 = vmul.f32 %v383, 0.5
        %v640 = vmul.f32 %v384, 0.5
        %v641 = vmul.f32 %v385, 0.5
        %v642 = vmul.f32 %v386, 0.5
        %v643 = vmul.f32 %v387, 0.5
        %v644 = vmul.f32 %v388, 0.5
        %v645 = vmul.f32 %v389, 0.5
        %v646 = vmul.f32 %v390, 0.5
        %v647 = vmul.f32 %v391, 0.5
        %v648 = vmul.f32 %v392, 0.5
        %v649 = vmul.f32 %v393, 0.5
        %v650 = vmul.f32 %v394, 1.442695
        %v651 = vpow.pop %v650
        %v652 = vmul.f32 %v395, 1.442695
        %v653 = vpow.pop %v652
        %v654 = vmul.f32 %v396, 1.442695
        %v655 = vpow.pop %v654
        %v656 = vmul.f32 %v397, 1.442695
        %v657 = vpow.pop %v656
        %v658 = vmul.f32 %v398, 1.442695
        %v659 = vpow.pop %v658
        %v660 = vmul.f32 %v399, 1.442695
        %v661 = vpow.pop %v660
        %v662 = vmul.f32 %v400, 1.442695
        %v663 = vpow.pop %v662
        %v664 = vmul.f32 %v401, 1.442695
        %v665 = vpow.pop %v664
        %v666 = vmul.f32 %v402, 1.442695
        %v667 = vpow.pop %v666
        %v668 = vmul.f32 %v403, 1.442695
        %v669 = vpow.pop %v668
        %v670 = vmul.f32 %v404, 1.442695
        %v671 = vpow.pop %v670
        %v672 = vmul.f32 %v405, 1.442695
        %v673 = vpow.pop %v672
        %v674 = vmul.f32 %v406, 1.442695
        %v675 = vpow.pop %v674
        %v676 = vmul.f32 %v407, 1.442695
        %v677 = vpow.pop %v676
        %v678 = vmul.f32 %v408, 1.442695
        %v679 = vpow.pop %v678
        %v680 = vmul.f32 %v409, 1.442695
        %v681 = vpow.pop %v680
        %v682 = vmul.f32 %v410, 1.442695
        %v683 = vpow.pop %v682
        %v684 = vmul.f32 %v411, 1.442695
        %v685 = vpow.pop %v684
        %v686 = vmul.f32 %v412, 1.442695
        %v687 = vpow.pop %v686
        %v688 = vmul.f32 %v413, 1.442695
        %v689 = vpow.pop %v688
        %v690 = vmul.f32 %v414, 1.442695
        %v691 = vpow.pop %v690
        %v692 = vmul.f32 %v415, 1.442695
        %v693 = vpow.pop %v692
        %v694 = vmul.f32 %v416, 1.442695
        %v695 = vpow.pop %v694
        %v696 = vmul.f32 %v417, 1.442695
        %v697 = vpow.pop %v696
        %v698 = vmul.f32 %v418, 1.442695
        %v699 = vpow.pop %v698
        %v700 = vmul.f32 %v419, 1.442695
        %v701 = vpow.pop %v700
        %v702 = vmul.f32 %v420, 1.442695
        %v703 = vpow.pop %v702
        %v704 = vmul.f32 %v421, 1.442695
        %v705 = vpow.pop %v704
        %v706 = vmul.f32 %v422, 1.442695
        %v707 = vpow.pop %v706
        %v708 = vmul.f32 %v423, 1.442695
        %v709 = vpow.pop %v708
        %v710 = vmul.f32 %v424, 1.442695
        %v711 = vpow.pop %v710
        %v712 = vmul.f32 %v425, 1.442695
        %v713 = vpow.pop %v712
        %v714 = vmul.f32 %v426, 1.442695
        %v715 = vpow.pop %v714
        %v716 = vmul.f32 %v427, 1.442695
        %v717 = vpow.pop %v716
        %v718 = vmul.f32 %v428, 1.442695
        %v719 = vpow.pop %v718
        %v720 = vmul.f32 %v429, 1.442695
        %v721 = vpow.pop %v720
        %v722 = vmul.f32 %v430, 1.442695
        %v723 = vpow.pop %v722
        %v724 = vmul.f32 %v431, 1.442695
        %v725 = vpow.pop %v724
        %v726 = vmul.f32 %v432, 1.442695
        %v727 = vpow.pop %v726
        %v728 = vmul.f32 %v433, 1.442695
        %v729 = vpow.pop %v728
        %v730 = vmul.f32 %v434, 1.442695
        %v731 = vpow.pop %v730
        %v732 = vmul.f32 %v435, 1.442695
        %v733 = vpow.pop %v732
        %v734 = vmul.f32 %v436, 1.442695
        %v735 = vpow.pop %v734
        %v736 = vmul.f32 %v437, 1.442695
        %v737 = vpow.pop %v736
        %v738 = vmul.f32 %v438, 1.442695
        %v739 = vpow.pop %v738
        %v740 = vmul.f32 %v439, 1.442695
        %v741 = vpow.pop %v740
        %v742 = vmul.f32 %v440, 1.442695
        %v743 = vpow.pop %v742
        %v744 = vmul.f32 %v441, 1.442695
        %v745 = vpow.pop %v744
        %v746 = vmul.f32 %v442, 1.442695
        %v747 = vpow.pop %v746
        %v748 = vmul.f32 %v443, 1.442695
        %v749 = vpow.pop %v748
        %v750 = vmul.f32 %v444, 1.442695
        %v751 = vpow.pop %v750
        %v752 = vmul.f32 %v445, 1.442695
        %v753 = vpow.pop %v752
        %v754 = vmul.f32 %v446, 1.442695
        %v755 = vpow.pop %v754
        %v756 = vmul.f32 %v447, 1.442695
        %v757 = vpow.pop %v756
        %v758 = vmul.f32 %v448, 1.442695
        %v759 = vpow.pop %v758
        %v760 = vmul.f32 %v449, 1.442695
        %v761 = vpow.pop %v760
        %v762 = vmul.f32 %v450, 1.442695
        %v763 = vpow.pop %v762
        %v764 = vmul.f32 %v451, 1.442695
        %v765 = vpow.pop %v764
        %v766 = vmul.f32 %v452, 1.442695
        %v767 = vpow.pop %v766
        %v768 = vmul.f32 %v453, 1.442695
        %v769 = vpow.pop %v768
        %v770 = vmul.f32 %v454, 1.442695
        %v771 = vpow.pop %v770
        %v772 = vmul.f32 %v455, 1.442695
        %v773 = vpow.pop %v772
        %v774 = vmul.f32 %v456, 1.442695
        %v775 = vpow.pop %v774
        %v776 = vmul.f32 %v457, 1.442695
        %v777 = vpow.pop %v776
        %v778 = vmul.f32 %v458, 1.442695
        %v779 = vpow.pop %v778
        %v780 = vmul.f32 %v459, 1.442695
        %v781 = vpow.pop %v780
        %v782 = vmul.f32 %v460, 1.442695
        %v783 = vpow.pop %v782
        %v784 = vmul.f32 %v461, 1.442695
        %v785 = vpow.pop %v784
        %v786 = vmul.f32 %v462, 1.442695
        %v787 = vpow.pop %v786
        %v788 = vmul.f32 %v463, 1.442695
        %v789 = vpow.pop %v788
        %v790 = vmul.f32 %v464, 1.442695
        %v791 = vpow.pop %v790
        %v792 = vmul.f32 %v465, 1.442695
        %v793 = vpow.pop %v792
        %v794 = vmul.f32 %v466, 1.442695
        %v795 = vpow.pop %v794
        %v796 = vmul.f32 %v467, 1.442695
        %v797 = vpow.pop %v796
        %v798 = vmul.f32 %v468, 1.442695
        %v799 = vpow.pop %v798
        %v800 = vmul.f32 %v469, 1.442695
        %v801 = vpow.pop %v800
        %v802 = vmul.f32 %v470, 1.442695
        %v803 = vpow.pop %v802
        %v804 = vmul.f32 %v471, 1.442695
        %v805 = vpow.pop %v804
        %v806 = vmul.f32 %v472, 1.442695
        %v807 = vpow.pop %v806
        %v808 = vmul.f32 %v473, 1.442695
        %v809 = vpow.pop %v808
        %v810 = vmul.f32 %v474, 1.442695
        %v811 = vpow.pop %v810
        %v812 = vmul.f32 %v475, 1.442695
        %v813 = vpow.pop %v812
        %v814 = vmul.f32 %v476, 1.442695
        %v815 = vpow.pop %v814
        %v816 = vmul.f32 %v477, 1.442695
        %v817 = vpow.pop %v816
        %v818 = vmul.f32 %v478, 1.442695
        %v819 = vpow.pop %v818
        %v820 = vmul.f32 %v479, 1.442695
        %v821 = vpow.pop %v820
        %v822 = vmul.f32 %v480, 1.442695
        %v823 = vpow.pop %v822
        %v824 = vmul.f32 %v481, 1.442695
        %v825 = vpow.pop %v824
        %v826 = vmul.f32 %v482, 1.442695
        %v827 = vpow.pop %v826
        %v828 = vmul.f32 %v483, 1.442695
        %v829 = vpow.pop %v828
        %v830 = vmul.f32 %v484, 1.442695
        %v831 = vpow.pop %v830
        %v832 = vmul.f32 %v485, 1.442695
        %v833 = vpow.pop %v832
        %v834 = vmul.f32 %v486, 1.442695
        %v835 = vpow.pop %v834
        %v836 = vmul.f32 %v487, 1.442695
        %v837 = vpow.pop %v836
        %v838 = vmul.f32 %v488, 1.442695
        %v839 = vpow.pop %v838
        %v840 = vmul.f32 %v489, 1.442695
        %v841 = vpow.pop %v840
        %v842 = vmul.f32 %v490, 1.442695
        %v843 = vpow.pop %v842
        %v844 = vmul.f32 %v491, 1.442695
        %v845 = vpow.pop %v844
        %v846 = vmul.f32 %v492, 1.442695
        %v847 = vpow.pop %v846
        %v848 = vmul.f32 %v493, 1.442695
        %v849 = vpow.pop %v848
        %v850 = vmul.f32 %v494, 1.442695
        %v851 = vpow.pop %v850
        %v852 = vmul.f32 %v495, 1.442695
        %v853 = vpow.pop %v852
        %v854 = vmul.f32 %v496, 1.442695
        %v855 = vpow.pop %v854
        %v856 = vmul.f32 %v497, 1.442695
        %v857 = vpow.pop %v856
        %v858 = vmul.f32 %v498, 1.442695
        %v859 = vpow.pop %v858
        %v860 = vmul.f32 %v499, 1.442695
        %v861 = vpow.pop %v860
        %v862 = vmul.f32 %v500, 1.442695
        %v863 = vpow.pop %v862
        %v864 = vmul.f32 %v501, 1.442695
        %v865 = vpow.pop %v864
        %v866 = vmul.f32 %v502, 1.442695
        %v867 = vpow.pop %v866
        %v868 = vmul.f32 %v503, 1.442695
        %v869 = vpow.pop %v868
        %v870 = vmul.f32 %v504, 1.442695
        %v871 = vpow.pop %v870
        %v872 = vmul.f32 %v505, 1.442695
        %v873 = vpow.pop %v872
        %v874 = vmul.f32 %v506, 1.442695
        %v875 = vpow.pop %v874
        %v876 = vmul.f32 %v507, 1.442695
        %v877 = vpow.pop %v876
        %v878 = vmul.f32 %v508, 1.442695
        %v879 = vpow.pop %v878
        %v880 = vmul.f32 %v509, 1.442695
        %v881 = vpow.pop %v880
        %v882 = vmul.f32 %v510, 1.442695
        %v883 = vpow.pop %v882
        %v884 = vmul.f32 %v511, 1.442695
        %v885 = vpow.pop %v884
        %v886 = vmul.f32 %v512, 1.442695
        %v887 = vpow.pop %v886
        %v888 = vmul.f32 %v513, 1.442695
        %v889 = vpow.pop %v888
        %v890 = vmul.f32 %v514, 1.442695
        %v891 = vpow.pop %v890
        %v892 = vmul.f32 %v515, 1.442695
        %v893 = vpow.pop %v892
        %v894 = vmul.f32 %v516, 1.442695
        %v895 = vpow.pop %v894
        %v896 = vmul.f32 %v517, 1.442695
        %v897 = vpow.pop %v896
        %v898 = vmul.f32 %v518, 1.442695
        %v899 = vpow.pop %v898
        %v900 = vmul.f32 %v519, 1.442695
        %v901 = vpow.pop %v900
        %v902 = vmul.f32 %v520, 1.442695
        %v903 = vpow.pop %v902
        %v904 = vmul.f32 %v521, 1.442695
        %v905 = vpow.pop %v904
        %v906 = vmul.f32 %v522, 1.442695
        %v907 = vpow.pop %v906
        %v908 = vmul.f32 %v523, 1.442695
        %v909 = vpow.pop %v908
        %v910 = vmul.f32 %v524, 1.442695
        %v911 = vpow.pop %v910
        %v912 = vmul.f32 %v525, 1.442695
        %v913 = vpow.pop %v912
        %v914 = vmul.f32 %v526, 1.442695
        %v915 = vpow.pop %v914
        %v916 = vmul.f32 %v527, 1.442695
        %v917 = vpow.pop %v916
        %v918 = vmul.f32 %v528, 1.442695
        %v919 = vpow.pop %v918
        %v920 = vmul.f32 %v529, 1.442695
        %v921 = vpow.pop %v920
        %v922 = vmul.f32 %v530, 1.442695
        %v923 = vpow.pop %v922
        %v924 = vmul.f32 %v531, 1.442695
        %v925 = vpow.pop %v924
        %v926 = vmul.f32 %v532, 1.442695
        %v927 = vpow.pop %v926
        %v928 = vmul.f32 %v533, 1.442695
        %v929 = vpow.pop %v928
        %v930 = vmul.f32 %v534, 1.442695
        %v931 = vpow.pop %v930
        %v932 = vmul.f32 %v535, 1.442695
        %v933 = vpow.pop %v932
        %v934 = vmul.f32 %v536, 1.442695
        %v935 = vpow.pop %v934
        %v936 = vmul.f32 %v537, 1.442695
        %v937 = vpow.pop %v936
        %v938 = vmul.f32 %v538, 1.442695
        %v939 = vpow.pop %v938
        %v940 = vmul.f32 %v539, 1.442695
        %v941 = vpow.pop %v940
        %v942 = vmul.f32 %v540, 1.442695
        %v943 = vpow.pop %v942
        %v944 = vmul.f32 %v541, 1.442695
        %v945 = vpow.pop %v944
        %v946 = vmul.f32 %v542, 1.442695
        %v947 = vpow.pop %v946
        %v948 = vmul.f32 %v543, 1.442695
        %v949 = vpow.pop %v948
        %v950 = vmul.f32 %v544, 1.442695
        %v951 = vpow.pop %v950
        %v952 = vmul.f32 %v545, 1.442695
        %v953 = vpow.pop %v952
        %v954 = vmul.f32 %v546, 1.442695
        %v955 = vpow.pop %v954
        %v956 = vmul.f32 %v547, 1.442695
        %v957 = vpow.pop %v956
        %v958 = vmul.f32 %v548, 1.442695
        %v959 = vpow.pop %v958
        %v960 = vmul.f32 %v549, 1.442695
        %v961 = vpow.pop %v960
        %v962 = vmul.f32 %v550, 1.442695
        %v963 = vpow.pop %v962
        %v964 = vmul.f32 %v551, 1.442695
        %v965 = vpow.pop %v964
        %v966 = vmul.f32 %v552, 1.442695
        %v967 = vpow.pop %v966
        %v968 = vmul.f32 %v553, 1.442695
        %v969 = vpow.pop %v968
        %v970 = vmul.f32 %v554, 1.442695
        %v971 = vpow.pop %v970
        %v972 = vmul.f32 %v555, 1.442695
        %v973 = vpow.pop %v972
        %v974 = vmul.f32 %v556, 1.442695
        %v975 = vpow.pop %v974
        %v976 = vmul.f32 %v557, 1.442695
        %v977 = vpow.pop %v976
        %v978 = vmul.f32 %v558, 1.442695
        %v979 = vpow.pop %v978
        %v980 = vmul.f32 %v559, 1.442695
        %v981 = vpow.pop %v980
        %v982 = vmul.f32 %v560, 1.442695
        %v983 = vpow.pop %v982
        %v984 = vmul.f32 %v561, 1.442695
        %v985 = vpow.pop %v984
        %v986 = vmul.f32 %v562, 1.442695
        %v987 = vpow.pop %v986
        %v988 = vmul.f32 %v563, 1.442695
        %v989 = vpow.pop %v988
        %v990 = vmul.f32 %v564, 1.442695
        %v991 = vpow.pop %v990
        %v992 = vmul.f32 %v565, 1.442695
        %v993 = vpow.pop %v992
        %v994 = vmul.f32 %v566, 1.442695
        %v995 = vpow.pop %v994
        %v996 = vmul.f32 %v567, 1.442695
        %v997 = vpow.pop %v996
        %v998 = vmul.f32 %v568, 1.442695
        %v999 = vpow.pop %v998
        %v1000 = vmul.f32 %v569, 1.442695
        %v1001 = vpow.pop %v1000
        %v1002 = vmul.f32 %v570, 1.442695
        %v1003 = vpow.pop %v1002
        %v1004 = vmul.f32 %v571, 1.442695
        %v1005 = vpow.pop %v1004
        %v1006 = vmul.f32 %v572, 1.442695
        %v1007 = vpow.pop %v1006
        %v1008 = vmul.f32 %v573, 1.442695
        %v1009 = vpow.pop %v1008
        %v1010 = vmul.f32 %v574, 1.442695
        %v1011 = vpow.pop %v1010
        %v1012 = vmul.f32 %v575, 1.442695
        %v1013 = vpow.pop %v1012
        %v1014 = vmul.f32 %v576, 1.442695
        %v1015 = vpow.pop %v1014
        %v1016 = vmul.f32 %v577, 1.442695
        %v1017 = vpow.pop %v1016
        %v1018 = vmul.f32 %v578, 1.442695
        %v1019 = vpow.pop %v1018
        %v1020 = vmul.f32 %v579, 1.442695
        %v1021 = vpow.pop %v1020
        %v1022 = vmul.f32 %v580, 1.442695
        %v1023 = vpow.pop %v1022
        %v1024 = vmul.f32 %v581, 1.442695
        %v1025 = vpow.pop %v1024
        %v1026 = vmul.f32 %v582, 1.442695
        %v1027 = vpow.pop %v1026
        %v1028 = vmul.f32 %v583, 1.442695
        %v1029 = vpow.pop %v1028
        %v1030 = vmul.f32 %v584, 1.442695
        %v1031 = vpow.pop %v1030
        %v1032 = vmul.f32 %v585, 1.442695
        %v1033 = vpow.pop %v1032
        %v1034 = vmul.f32 %v586, 1.442695
        %v1035 = vpow.pop %v1034
        %v1036 = vmul.f32 %v587, 1.442695
        %v1037 = vpow.pop %v1036
        %v1038 = vmul.f32 %v588, 1.442695
        %v1039 = vpow.pop %v1038
        %v1040 = vmul.f32 %v589, 1.442695
        %v1041 = vpow.pop %v1040
        %v1042 = vmul.f32 %v590, 1.442695
        %v1043 = vpow.pop %v1042
        %v1044 = vmul.f32 %v591, 1.442695
        %v1045 = vpow.pop %v1044
        %v1046 = vmul.f32 %v592, 1.442695
        %v1047 = vpow.pop %v1046
        %v1048 = vmul.f32 %v593, 1.442695
        %v1049 = vpow.pop %v1048
        %v1050 = vmul.f32 %v594, 1.442695
        %v1051 = vpow.pop %v1050
        %v1052 = vmul.f32 %v595, 1.442695
        %v1053 = vpow.pop %v1052
        %v1054 = vmul.f32 %v596, 1.442695
        %v1055 = vpow.pop %v1054
        %v1056 = vmul.f32 %v597, 1.442695
        %v1057 = vpow.pop %v1056
        %v1058 = vmul.f32 %v598, 1.442695
        %v1059 = vpow.pop %v1058
        %v1060 = vmul.f32 %v599, 1.442695
        %v1061 = vpow.pop %v1060
        %v1062 = vmul.f32 %v600, 1.442695
        %v1063 = vpow.pop %v1062
        %v1064 = vmul.f32 %v601, 1.442695
        %v1065 = vpow.pop %v1064
        %v1066 = vmul.f32 %v602, 1.442695
        %v1067 = vpow.pop %v1066
        %v1068 = vmul.f32 %v603, 1.442695
        %v1069 = vpow.pop %v1068
        %v1070 = vmul.f32 %v604, 1.442695
        %v1071 = vpow.pop %v1070
        %v1072 = vmul.f32 %v605, 1.442695
        %v1073 = vpow.pop %v1072
        %v1074 = vmul.f32 %v606, 1.442695
        %v1075 = vpow.pop %v1074
        %v1076 = vmul.f32 %v607, 1.442695
        %v1077 = vpow.pop %v1076
        %v1078 = vmul.f32 %v608, 1.442695
        %v1079 = vpow.pop %v1078
        %v1080 = vmul.f32 %v609, 1.442695
        %v1081 = vpow.pop %v1080
        %v1082 = vmul.f32 %v610, 1.442695
        %v1083 = vpow.pop %v1082
        %v1084 = vmul.f32 %v611, 1.442695
        %v1085 = vpow.pop %v1084
        %v1086 = vmul.f32 %v612, 1.442695
        %v1087 = vpow.pop %v1086
        %v1088 = vmul.f32 %v613, 1.442695
        %v1089 = vpow.pop %v1088
        %v1090 = vmul.f32 %v614, 1.442695
        %v1091 = vpow.pop %v1090
        %v1092 = vmul.f32 %v615, 1.442695
        %v1093 = vpow.pop %v1092
        %v1094 = vmul.f32 %v616, 1.442695
        %v1095 = vpow.pop %v1094
        %v1096 = vmul.f32 %v617, 1.442695
        %v1097 = vpow.pop %v1096
        %v1098 = vmul.f32 %v618, 1.442695
        %v1099 = vpow.pop %v1098
        %v1100 = vmul.f32 %v619, 1.442695
        %v1101 = vpow.pop %v1100
        %v1102 = vmul.f32 %v620, 1.442695
        %v1103 = vpow.pop %v1102
        %v1104 = vmul.f32 %v621, 1.442695
        %v1105 = vpow.pop %v1104
        %v1106 = vmul.f32 %v622, 1.442695
        %v1107 = vpow.pop %v1106
        %v1108 = vmul.f32 %v623, 1.442695
        %v1109 = vpow.pop %v1108
        %v1110 = vmul.f32 %v624, 1.442695
        %v1111 = vpow.pop %v1110
        %v1112 = vmul.f32 %v625, 1.442695
        %v1113 = vpow.pop %v1112
        %v1114 = vmul.f32 %v626, 1.442695
        %v1115 = vpow.pop %v1114
        %v1116 = vmul.f32 %v627, 1.442695
        %v1117 = vpow.pop %v1116
        %v1118 = vmul.f32 %v628, 1.442695
        %v1119 = vpow.pop %v1118
        %v1120 = vmul.f32 %v629, 1.442695
        %v1121 = vpow.pop %v1120
        %v1122 = vmul.f32 %v630, 1.442695
        %v1123 = vpow.pop %v1122
        %v1124 = vmul.f32 %v631, 1.442695
        %v1125 = vpow.pop %v1124
        %v1126 = vmul.f32 %v632, 1.442695
        %v1127 = vpow.pop %v1126
        %v1128 = vmul.f32 %v633, 1.442695
        %v1129 = vpow.pop %v1128
        %v1130 = vmul.f32 %v634, 1.442695
        %v1131 = vpow.pop %v1130
        %v1132 = vmul.f32 %v635, 1.442695
        %v1133 = vpow.pop %v1132
        %v1134 = vmul.f32 %v636, 1.442695
        %v1135 = vpow.pop %v1134
        %v1136 = vmul.f32 %v637, 1.442695
        %v1137 = vpow.pop %v1136
        %v1138 = vmul.f32 %v638, 1.442695
        %v1139 = vpow.pop %v1138
        %v1140 = vmul.f32 %v639, 1.442695
        %v1141 = vpow.pop %v1140
        %v1142 = vmul.f32 %v640, 1.442695
        %v1143 = vpow.pop %v1142
        %v1144 = vmul.f32 %v641, 1.442695
        %v1145 = vpow.pop %v1144
        %v1146 = vmul.f32 %v642, 1.442695
        %v1147 = vpow.pop %v1146
        %v1148 = vmul.f32 %v643, 1.442695
        %v1149 = vpow.pop %v1148
        %v1150 = vmul.f32 %v644, 1.442695
        %v1151 = vpow.pop %v1150
        %v1152 = vmul.f32 %v645, 1.442695
        %v1153 = vpow.pop %v1152
        %v1154 = vmul.f32 %v646, 1.442695
        %v1155 = vpow.pop %v1154
        %v1156 = vmul.f32 %v647, 1.442695
        %v1157 = vpow.pop %v1156
        %v1158 = vmul.f32 %v648, 1.442695
        %v1159 = vpow.pop %v1158
        %v1160 = vmul.f32 %v649, 1.442695
        %v1161 = vpow.pop %v1160
        %1162 = vst [vmem:[%s135] sm:$0xff] %v651
        %1163 = vst [vmem:[%s135 + $0x8] sm:$0xff] %v653
        %1164 = vst [vmem:[%s135 + $0x10] sm:$0xff] %v655
        %1165 = vst [vmem:[%s135 + $0x18] sm:$0xff] %v657
        %1166 = vst [vmem:[%s135 + $0x20] sm:$0xff] %v659
        %1167 = vst [vmem:[%s135 + $0x28] sm:$0xff] %v661
        %1168 = vst [vmem:[%s135 + $0x30] sm:$0xff] %v663
        %1169 = vst [vmem:[%s135 + $0x38] sm:$0xff] %v665
        %1170 = vst [vmem:[%s135 + $0x40] sm:$0xff] %v667
        %1171 = vst [vmem:[%s135 + $0x48] sm:$0xff] %v669
        %1172 = vst [vmem:[%s135 + $0x50] sm:$0xff] %v671
        %1173 = vst [vmem:[%s135 + $0x58] sm:$0xff] %v673
        %1174 = vst [vmem:[%s135 + $0x60] sm:$0xff] %v675
        %1175 = vst [vmem:[%s135 + $0x68] sm:$0xff] %v677
        %1176 = vst [vmem:[%s135 + $0x70] sm:$0xff] %v679
        %1177 = vst [vmem:[%s135 + $0x78] sm:$0xff] %v681
        %1178 = vst [vmem:[%s135 + $0x80] sm:$0xff] %v683
        %1179 = vst [vmem:[%s135 + $0x88] sm:$0xff] %v685
        %1180 = vst [vmem:[%s135 + $0x90] sm:$0xff] %v687
        %1181 = vst [vmem:[%s135 + $0x98] sm:$0xff] %v689
        %1182 = vst [vmem:[%s135 + $0xa0] sm:$0xff] %v691
        %1183 = vst [vmem:[%s135 + $0xa8] sm:$0xff] %v693
        %1184 = vst [vmem:[%s135 + $0xb0] sm:$0xff] %v695
        %1185 = vst [vmem:[%s135 + $0xb8] sm:$0xff] %v697
        %1186 = vst [vmem:[%s135 + $0xc0] sm:$0xff] %v699
        %1187 = vst [vmem:[%s135 + $0xc8] sm:$0xff] %v701
        %1188 = vst [vmem:[%s135 + $0xd0] sm:$0xff] %v703
        %1189 = vst [vmem:[%s135 + $0xd8] sm:$0xff] %v705
        %1190 = vst [vmem:[%s135 + $0xe0] sm:$0xff] %v707
        %1191 = vst [vmem:[%s135 + $0xe8] sm:$0xff] %v709
        %1192 = vst [vmem:[%s135 + $0xf0] sm:$0xff] %v711
        %1193 = vst [vmem:[%s135 + $0xf8] sm:$0xff] %v713
        %1194 = vst [vmem:[%s135 + $0x100] sm:$0xff] %v715
        %1195 = vst [vmem:[%s135 + $0x108] sm:$0xff] %v717
        %1196 = vst [vmem:[%s135 + $0x110] sm:$0xff] %v719
        %1197 = vst [vmem:[%s135 + $0x118] sm:$0xff] %v721
        %1198 = vst [vmem:[%s135 + $0x120] sm:$0xff] %v723
        %1199 = vst [vmem:[%s135 + $0x128] sm:$0xff] %v725
        %1200 = vst [vmem:[%s135 + $0x130] sm:$0xff] %v727
        %1201 = vst [vmem:[%s135 + $0x138] sm:$0xff] %v729
        %1202 = vst [vmem:[%s135 + $0x140] sm:$0xff] %v731
        %1203 = vst [vmem:[%s135 + $0x148] sm:$0xff] %v733
        %1204 = vst [vmem:[%s135 + $0x150] sm:$0xff] %v735
        %1205 = vst [vmem:[%s135 + $0x158] sm:$0xff] %v737
        %1206 = vst [vmem:[%s135 + $0x160] sm:$0xff] %v739
        %1207 = vst [vmem:[%s135 + $0x168] sm:$0xff] %v741
        %1208 = vst [vmem:[%s135 + $0x170] sm:$0xff] %v743
        %1209 = vst [vmem:[%s135 + $0x178] sm:$0xff] %v745
        %1210 = vst [vmem:[%s135 + $0x180] sm:$0xff] %v747
        %1211 = vst [vmem:[%s135 + $0x188] sm:$0xff] %v749
        %1212 = vst [vmem:[%s135 + $0x190] sm:$0xff] %v751
        %1213 = vst [vmem:[%s135 + $0x198] sm:$0xff] %v753
        %1214 = vst [vmem:[%s135 + $0x1a0] sm:$0xff] %v755
        %1215 = vst [vmem:[%s135 + $0x1a8] sm:$0xff] %v757
        %1216 = vst [vmem:[%s135 + $0x1b0] sm:$0xff] %v759
        %1217 = vst [vmem:[%s135 + $0x1b8] sm:$0xff] %v761
        %1218 = vst [vmem:[%s135 + $0x1c0] sm:$0xff] %v763
        %1219 = vst [vmem:[%s135 + $0x1c8] sm:$0xff] %v765
        %1220 = vst [vmem:[%s135 + $0x1d0] sm:$0xff] %v767
        %1221 = vst [vmem:[%s135 + $0x1d8] sm:$0xff] %v769
        %1222 = vst [vmem:[%s135 + $0x1e0] sm:$0xff] %v771
        %1223 = vst [vmem:[%s135 + $0x1e8] sm:$0xff] %v773
        %1224 = vst [vmem:[%s135 + $0x1f0] sm:$0xff] %v775
        %1225 = vst [vmem:[%s135 + $0x1f8] sm:$0xff] %v777
        %1226 = vst [vmem:[%s135 + $0x200] sm:$0xff] %v779
        %1227 = vst [vmem:[%s135 + $0x208] sm:$0xff] %v781
        %1228 = vst [vmem:[%s135 + $0x210] sm:$0xff] %v783
        %1229 = vst [vmem:[%s135 + $0x218] sm:$0xff] %v785
        %1230 = vst [vmem:[%s135 + $0x220] sm:$0xff] %v787
        %1231 = vst [vmem:[%s135 + $0x228] sm:$0xff] %v789
        %1232 = vst [vmem:[%s135 + $0x230] sm:$0xff] %v791
        %1233 = vst [vmem:[%s135 + $0x238] sm:$0xff] %v793
        %1234 = vst [vmem:[%s135 + $0x240] sm:$0xff] %v795
        %1235 = vst [vmem:[%s135 + $0x248] sm:$0xff] %v797
        %1236 = vst [vmem:[%s135 + $0x250] sm:$0xff] %v799
        %1237 = vst [vmem:[%s135 + $0x258] sm:$0xff] %v801
        %1238 = vst [vmem:[%s135 + $0x260] sm:$0xff] %v803
        %1239 = vst [vmem:[%s135 + $0x268] sm:$0xff] %v805
        %1240 = vst [vmem:[%s135 + $0x270] sm:$0xff] %v807
        %1241 = vst [vmem:[%s135 + $0x278] sm:$0xff] %v809
        %1242 = vst [vmem:[%s135 + $0x280] sm:$0xff] %v811
        %1243 = vst [vmem:[%s135 + $0x288] sm:$0xff] %v813
        %1244 = vst [vmem:[%s135 + $0x290] sm:$0xff] %v815
        %1245 = vst [vmem:[%s135 + $0x298] sm:$0xff] %v817
        %1246 = vst [vmem:[%s135 + $0x2a0] sm:$0xff] %v819
        %1247 = vst [vmem:[%s135 + $0x2a8] sm:$0xff] %v821
        %1248 = vst [vmem:[%s135 + $0x2b0] sm:$0xff] %v823
        %1249 = vst [vmem:[%s135 + $0x2b8] sm:$0xff] %v825
        %1250 = vst [vmem:[%s135 + $0x2c0] sm:$0xff] %v827
        %1251 = vst [vmem:[%s135 + $0x2c8] sm:$0xff] %v829
        %1252 = vst [vmem:[%s135 + $0x2d0] sm:$0xff] %v831
        %1253 = vst [vmem:[%s135 + $0x2d8] sm:$0xff] %v833
        %1254 = vst [vmem:[%s135 + $0x2e0] sm:$0xff] %v835
        %1255 = vst [vmem:[%s135 + $0x2e8] sm:$0xff] %v837
        %1256 = vst [vmem:[%s135 + $0x2f0] sm:$0xff] %v839
        %1257 = vst [vmem:[%s135 + $0x2f8] sm:$0xff] %v841
        %1258 = vst [vmem:[%s135 + $0x300] sm:$0xff] %v843
        %1259 = vst [vmem:[%s135 + $0x308] sm:$0xff] %v845
        %1260 = vst [vmem:[%s135 + $0x310] sm:$0xff] %v847
        %1261 = vst [vmem:[%s135 + $0x318] sm:$0xff] %v849
        %1262 = vst [vmem:[%s135 + $0x320] sm:$0xff] %v851
        %1263 = vst [vmem:[%s135 + $0x328] sm:$0xff] %v853
        %1264 = vst [vmem:[%s135 + $0x330] sm:$0xff] %v855
        %1265 = vst [vmem:[%s135 + $0x338] sm:$0xff] %v857
        %1266 = vst [vmem:[%s135 + $0x340] sm:$0xff] %v859
        %1267 = vst [vmem:[%s135 + $0x348] sm:$0xff] %v861
        %1268 = vst [vmem:[%s135 + $0x350] sm:$0xff] %v863
        %1269 = vst [vmem:[%s135 + $0x358] sm:$0xff] %v865
        %1270 = vst [vmem:[%s135 + $0x360] sm:$0xff] %v867
        %1271 = vst [vmem:[%s135 + $0x368] sm:$0xff] %v869
        %1272 = vst [vmem:[%s135 + $0x370] sm:$0xff] %v871
        %1273 = vst [vmem:[%s135 + $0x378] sm:$0xff] %v873
        %1274 = vst [vmem:[%s135 + $0x380] sm:$0xff] %v875
        %1275 = vst [vmem:[%s135 + $0x388] sm:$0xff] %v877
        %1276 = vst [vmem:[%s135 + $0x390] sm:$0xff] %v879
        %1277 = vst [vmem:[%s135 + $0x398] sm:$0xff] %v881
        %1278 = vst [vmem:[%s135 + $0x3a0] sm:$0xff] %v883
        %1279 = vst [vmem:[%s135 + $0x3a8] sm:$0xff] %v885
        %1280 = vst [vmem:[%s135 + $0x3b0] sm:$0xff] %v887
        %1281 = vst [vmem:[%s135 + $0x3b8] sm:$0xff] %v889
        %1282 = vst [vmem:[%s135 + $0x3c0] sm:$0xff] %v891
        %1283 = vst [vmem:[%s135 + $0x3c8] sm:$0xff] %v893
        %1284 = vst [vmem:[%s135 + $0x3d0] sm:$0xff] %v895
        %1285 = vst [vmem:[%s135 + $0x3d8] sm:$0xff] %v897
        %1286 = vst [vmem:[%s135 + $0x3e0] sm:$0xff] %v899
        %1287 = vst [vmem:[%s135 + $0x3e8] sm:$0xff] %v901
        %1288 = vst [vmem:[%s135 + $0x3f0] sm:$0xff] %v903
        %1289 = vst [vmem:[%s135 + $0x3f8] sm:$0xff] %v905
        %1290 = vst [vmem:[%s135 + $0x400] sm:$0xff] %v907
        %1291 = vst [vmem:[%s135 + $0x408] sm:$0xff] %v909
        %1292 = vst [vmem:[%s135 + $0x410] sm:$0xff] %v911
        %1293 = vst [vmem:[%s135 + $0x418] sm:$0xff] %v913
        %1294 = vst [vmem:[%s135 + $0x420] sm:$0xff] %v915
        %1295 = vst [vmem:[%s135 + $0x428] sm:$0xff] %v917
        %1296 = vst [vmem:[%s135 + $0x430] sm:$0xff] %v919
        %1297 = vst [vmem:[%s135 + $0x438] sm:$0xff] %v921
        %1298 = vst [vmem:[%s135 + $0x440] sm:$0xff] %v923
        %1299 = vst [vmem:[%s135 + $0x448] sm:$0xff] %v925
        %1300 = vst [vmem:[%s135 + $0x450] sm:$0xff] %v927
        %1301 = vst [vmem:[%s135 + $0x458] sm:$0xff] %v929
        %1302 = vst [vmem:[%s135 + $0x460] sm:$0xff] %v931
        %1303 = vst [vmem:[%s135 + $0x468] sm:$0xff] %v933
        %1304 = vst [vmem:[%s135 + $0x470] sm:$0xff] %v935
        %1305 = vst [vmem:[%s135 + $0x478] sm:$0xff] %v937
        %1306 = vst [vmem:[%s135 + $0x480] sm:$0xff] %v939
        %1307 = vst [vmem:[%s135 + $0x488] sm:$0xff] %v941
        %1308 = vst [vmem:[%s135 + $0x490] sm:$0xff] %v943
        %1309 = vst [vmem:[%s135 + $0x498] sm:$0xff] %v945
        %1310 = vst [vmem:[%s135 + $0x4a0] sm:$0xff] %v947
        %1311 = vst [vmem:[%s135 + $0x4a8] sm:$0xff] %v949
        %1312 = vst [vmem:[%s135 + $0x4b0] sm:$0xff] %v951
        %1313 = vst [vmem:[%s135 + $0x4b8] sm:$0xff] %v953
        %1314 = vst [vmem:[%s135 + $0x4c0] sm:$0xff] %v955
        %1315 = vst [vmem:[%s135 + $0x4c8] sm:$0xff] %v957
        %1316 = vst [vmem:[%s135 + $0x4d0] sm:$0xff] %v959
        %1317 = vst [vmem:[%s135 + $0x4d8] sm:$0xff] %v961
        %1318 = vst [vmem:[%s135 + $0x4e0] sm:$0xff] %v963
        %1319 = vst [vmem:[%s135 + $0x4e8] sm:$0xff] %v965
        %1320 = vst [vmem:[%s135 + $0x4f0] sm:$0xff] %v967
        %1321 = vst [vmem:[%s135 + $0x4f8] sm:$0xff] %v969
        %1322 = vst [vmem:[%s135 + $0x500] sm:$0xff] %v971
        %1323 = vst [vmem:[%s135 + $0x508] sm:$0xff] %v973
        %1324 = vst [vmem:[%s135 + $0x510] sm:$0xff] %v975
        %1325 = vst [vmem:[%s135 + $0x518] sm:$0xff] %v977
        %1326 = vst [vmem:[%s135 + $0x520] sm:$0xff] %v979
        %1327 = vst [vmem:[%s135 + $0x528] sm:$0xff] %v981
        %1328 = vst [vmem:[%s135 + $0x530] sm:$0xff] %v983
        %1329 = vst [vmem:[%s135 + $0x538] sm:$0xff] %v985
        %1330 = vst [vmem:[%s135 + $0x540] sm:$0xff] %v987
        %1331 = vst [vmem:[%s135 + $0x548] sm:$0xff] %v989
        %1332 = vst [vmem:[%s135 + $0x550] sm:$0xff] %v991
        %1333 = vst [vmem:[%s135 + $0x558] sm:$0xff] %v993
        %1334 = vst [vmem:[%s135 + $0x560] sm:$0xff] %v995
        %1335 = vst [vmem:[%s135 + $0x568] sm:$0xff] %v997
        %1336 = vst [vmem:[%s135 + $0x570] sm:$0xff] %v999
        %1337 = vst [vmem:[%s135 + $0x578] sm:$0xff] %v1001
        %1338 = vst [vmem:[%s135 + $0x580] sm:$0xff] %v1003
        %1339 = vst [vmem:[%s135 + $0x588] sm:$0xff] %v1005
        %1340 = vst [vmem:[%s135 + $0x590] sm:$0xff] %v1007
        %1341 = vst [vmem:[%s135 + $0x598] sm:$0xff] %v1009
        %1342 = vst [vmem:[%s135 + $0x5a0] sm:$0xff] %v1011
        %1343 = vst [vmem:[%s135 + $0x5a8] sm:$0xff] %v1013
        %1344 = vst [vmem:[%s135 + $0x5b0] sm:$0xff] %v1015
        %1345 = vst [vmem:[%s135 + $0x5b8] sm:$0xff] %v1017
        %1346 = vst [vmem:[%s135 + $0x5c0] sm:$0xff] %v1019
        %1347 = vst [vmem:[%s135 + $0x5c8] sm:$0xff] %v1021
        %1348 = vst [vmem:[%s135 + $0x5d0] sm:$0xff] %v1023
        %1349 = vst [vmem:[%s135 + $0x5d8] sm:$0xff] %v1025
        %1350 = vst [vmem:[%s135 + $0x5e0] sm:$0xff] %v1027
        %1351 = vst [vmem:[%s135 + $0x5e8] sm:$0xff] %v1029
        %1352 = vst [vmem:[%s135 + $0x5f0] sm:$0xff] %v1031
        %1353 = vst [vmem:[%s135 + $0x5f8] sm:$0xff] %v1033
        %1354 = vst [vmem:[%s135 + $0x600] sm:$0xff] %v1035
        %1355 = vst [vmem:[%s135 + $0x608] sm:$0xff] %v1037
        %1356 = vst [vmem:[%s135 + $0x610] sm:$0xff] %v1039
        %1357 = vst [vmem:[%s135 + $0x618] sm:$0xff] %v1041
        %1358 = vst [vmem:[%s135 + $0x620] sm:$0xff] %v1043
        %1359 = vst [vmem:[%s135 + $0x628] sm:$0xff] %v1045
        %1360 = vst [vmem:[%s135 + $0x630] sm:$0xff] %v1047
        %1361 = vst [vmem:[%s135 + $0x638] sm:$0xff] %v1049
        %1362 = vst [vmem:[%s135 + $0x640] sm:$0xff] %v1051
        %1363 = vst [vmem:[%s135 + $0x648] sm:$0xff] %v1053
        %1364 = vst [vmem:[%s135 + $0x650] sm:$0xff] %v1055
        %1365 = vst [vmem:[%s135 + $0x658] sm:$0xff] %v1057
        %1366 = vst [vmem:[%s135 + $0x660] sm:$0xff] %v1059
        %1367 = vst [vmem:[%s135 + $0x668] sm:$0xff] %v1061
        %1368 = vst [vmem:[%s135 + $0x670] sm:$0xff] %v1063
        %1369 = vst [vmem:[%s135 + $0x678] sm:$0xff] %v1065
        %1370 = vst [vmem:[%s135 + $0x680] sm:$0xff] %v1067
        %1371 = vst [vmem:[%s135 + $0x688] sm:$0xff] %v1069
        %1372 = vst [vmem:[%s135 + $0x690] sm:$0xff] %v1071
        %1373 = vst [vmem:[%s135 + $0x698] sm:$0xff] %v1073
        %1374 = vst [vmem:[%s135 + $0x6a0] sm:$0xff] %v1075
        %1375 = vst [vmem:[%s135 + $0x6a8] sm:$0xff] %v1077
        %1376 = vst [vmem:[%s135 + $0x6b0] sm:$0xff] %v1079
        %1377 = vst [vmem:[%s135 + $0x6b8] sm:$0xff] %v1081
        %1378 = vst [vmem:[%s135 + $0x6c0] sm:$0xff] %v1083
        %1379 = vst [vmem:[%s135 + $0x6c8] sm:$0xff] %v1085
        %1380 = vst [vmem:[%s135 + $0x6d0] sm:$0xff] %v1087
        %1381 = vst [vmem:[%s135 + $0x6d8] sm:$0xff] %v1089
        %1382 = vst [vmem:[%s135 + $0x6e0] sm:$0xff] %v1091
        %1383 = vst [vmem:[%s135 + $0x6e8] sm:$0xff] %v1093
        %1384 = vst [vmem:[%s135 + $0x6f0] sm:$0xff] %v1095
        %1385 = vst [vmem:[%s135 + $0x6f8] sm:$0xff] %v1097
        %1386 = vst [vmem:[%s135 + $0x700] sm:$0xff] %v1099
        %1387 = vst [vmem:[%s135 + $0x708] sm:$0xff] %v1101
        %1388 = vst [vmem:[%s135 + $0x710] sm:$0xff] %v1103
        %1389 = vst [vmem:[%s135 + $0x718] sm:$0xff] %v1105
        %1390 = vst [vmem:[%s135 + $0x720] sm:$0xff] %v1107
        %1391 = vst [vmem:[%s135 + $0x728] sm:$0xff] %v1109
        %1392 = vst [vmem:[%s135 + $0x730] sm:$0xff] %v1111
        %1393 = vst [vmem:[%s135 + $0x738] sm:$0xff] %v1113
        %1394 = vst [vmem:[%s135 + $0x740] sm:$0xff] %v1115
        %1395 = vst [vmem:[%s135 + $0x748] sm:$0xff] %v1117
        %1396 = vst [vmem:[%s135 + $0x750] sm:$0xff] %v1119
        %1397 = vst [vmem:[%s135 + $0x758] sm:$0xff] %v1121
        %1398 = vst [vmem:[%s135 + $0x760] sm:$0xff] %v1123
        %1399 = vst [vmem:[%s135 + $0x768] sm:$0xff] %v1125
        %1400 = vst [vmem:[%s135 + $0x770] sm:$0xff] %v1127
        %1401 = vst [vmem:[%s135 + $0x778] sm:$0xff] %v1129
        %1402 = vst [vmem:[%s135 + $0x780] sm:$0xff] %v1131
        %1403 = vst [vmem:[%s135 + $0x788] sm:$0xff] %v1133
        %1404 = vst [vmem:[%s135 + $0x790] sm:$0xff] %v1135
        %1405 = vst [vmem:[%s135 + $0x798] sm:$0xff] %v1137
        %1406 = vst [vmem:[%s135 + $0x7a0] sm:$0xff] %v1139
        %1407 = vst [vmem:[%s135 + $0x7a8] sm:$0xff] %v1141
        %1408 = vst [vmem:[%s135 + $0x7b0] sm:$0xff] %v1143
        %1409 = vst [vmem:[%s135 + $0x7b8] sm:$0xff] %v1145
        %1410 = vst [vmem:[%s135 + $0x7c0] sm:$0xff] %v1147
        %1411 = vst [vmem:[%s135 + $0x7c8] sm:$0xff] %v1149
        %1412 = vst [vmem:[%s135 + $0x7d0] sm:$0xff] %v1151
        %1413 = vst [vmem:[%s135 + $0x7d8] sm:$0xff] %v1153
        %1414 = vst [vmem:[%s135 + $0x7e0] sm:$0xff] %v1155
        %1415 = vst [vmem:[%s135 + $0x7e8] sm:$0xff] %v1157
        %1416 = vst [vmem:[%s135 + $0x7f0] sm:$0xff] %v1159
        %1417 = vst [vmem:[%s135 + $0x7f8] sm:$0xff] %v1161
        %s1418 = sand.u32 %s52, 1
        %s1419 = scalar_lea.sflag [#allocation4], %s1418
        %s1420 = sand.u32 %s52, 1
        %s1421 = smul.addr %s1420, 2048
        %s1422 = scalar_lea.vmem [#allocation5], %s1421
        // Predicated region
        $region29: #{tpu_custom_call.1} parent=23 // pred_check
          %p1423 = pneg %p62
        $region30: #{tpu_custom_call.1} parent=23 // pred_check_branch
          %1425 = sbr.rel (%p1423) target = $region32
        $region31: #{tpu_custom_call.1} parent=23 // pred_region
          %s1426 = smul.u32 32, %s18
          %s1428 = ssub.s32 32768, 32768
          %1429 = vsyncadd %s1419, %s1428
          %s1430 = smul.addr %s1426, 8
          %s1431 = smul.addr %s1430, 128
          %s1432 = scalar_lea.hbm %s1, %s1431
          %s1433 = sshll.u32 %s1422, 4
          %s1434 = int_to_ptr.vmem [resolvable:$true] %s1433
          %1439 = dma.vmem_to_hbm [thread:$0]  %s1434, 32768, %s1432, %s1419, 1024, 1024, 64
        $region32: #{tpu_custom_call.1} parent=23 // pred_fallthru
          _
      $region24: #{tpu_custom_call.1} parent=5 // pred_fallthru
        _
      %p1440 = scmp.le.s32.totalorder 2, %s13
      // Predicated region
      $region33: #{tpu_custom_call.1} parent=5 // pred_check
        %p1441 = pneg %p1440
      $region34: #{tpu_custom_call.1} parent=5 // pred_check_branch
        %1443 = sbr.rel (%p1441) target = $region36
      $region35: #{tpu_custom_call.1} parent=5 // pred_region
        %s1444 = ssub.s32 %s13, 2
        // Predicated region
        $region37: #{tpu_custom_call.1} parent=35 // pred_check
          %p1445 = pneg %p68
        $region38: #{tpu_custom_call.1} parent=35 // pred_check_branch
          %1447 = sbr.rel (%p1445) target = $region40
        $region39: #{tpu_custom_call.1} parent=35 // pred_region
          %s1448 = sand.u32 %s53, 1
          %s1449 = scalar_lea.sflag [#allocation4], %s1448
          %s1450 = sand.u32 %s53, 1
          %s1451 = smul.addr %s1450, 2048
          %s1452 = scalar_lea.vmem [#allocation5], %s1451
          %1453 = dma.done %s1449, 32768
        $region40: #{tpu_custom_call.1} parent=35 // pred_fallthru
          _
      $region36: #{tpu_custom_call.1} parent=5 // pred_fallthru
        _
    $region6: #{tpu_custom_call.1} parent=1 // loop_footer
      %s17 = sadd.s32 1, %s13
    $region7: #{tpu_custom_call.1} parent=1 // loop_footer_branch
      %12 = sbr.rel target = $region3
    $region8: #{tpu_custom_call.1} parent=1 // loop_exit
      _
    %1454 = vsyncpa [#allocation3], 1
    %s1455 = scalar_lea.sflag [#allocation3], 1
    %1456 = vsyncpa %s1455, 1
    %1457 = vsyncpa [#allocation4], 1
    %s1458 = scalar_lea.sflag [#allocation4], 1
    %1459 = vsyncpa %s1458, 1

</llo_original>
